<compile_context>
chip_gen: v6e
topology: v6e:2x2x1
jax: 0.10.0
libtpu: 0.0.40
codegen_flags: <defaults>
</compile_context>

<pallas_src>
import jax
import jax.numpy as jnp
from jax.experimental import pallas as pl
from jax.experimental.pallas import tpu as pltpu


def fft_encoder_kernel(x_ref, w1_ref, b1_ref, w2_ref, b2_ref, out_ref, acc_ref):
    """Fused MLP with K-pipelined layer-1 accumulation.

    out = relu(relu(x @ W1 + b1) @ W2 + b2)   (dropout == identity, eval mode)
    """
    k = pl.program_id(0)

    @pl.when(k == 0)
    def _():
        acc_ref[...] = jnp.zeros_like(acc_ref)

    # Layer-1 partial product: cast the x tile to bf16 in-kernel and hit the
    # native bf16 MXU path with f32 accumulation.
    acc_ref[...] += jnp.dot(
        x_ref[...].astype(w1_ref.dtype), w1_ref[...],
        preferred_element_type=jnp.float32)

    @pl.when(k == pl.num_programs(0) - 1)
    def _():
        h = jnp.maximum(acc_ref[...] + b1_ref[...], 0.0)
        # Dropout == identity in eval mode.
        y = jnp.dot(h.astype(w2_ref.dtype), w2_ref[...],
                    preferred_element_type=jnp.float32)
        y = jnp.maximum(y + b2_ref[...], 0.0)
        out_ref[...] = y.astype(out_ref.dtype)


def prepare_fft_encoder_params(w1, b1, w2, b2, *, compute_dtype=jnp.bfloat16):
    """One-time ("module init") prep: cast weights to bf16, pad W2/b2 to a
    lane-dense output width. The per-call wrapper just forwards these."""
    K, H = w1.shape
    F = w2.shape[1]
    F_pad = ((F + 127) // 128) * 128

    w1c = jnp.asarray(w1, dtype=compute_dtype)
    w2c = jnp.asarray(w2, dtype=compute_dtype)
    b1c = jnp.asarray(b1, dtype=jnp.float32).reshape(1, H)
    b2c = jnp.asarray(b2, dtype=jnp.float32).reshape(1, F)

    if F_pad != F:
        w2c = jnp.pad(w2c, ((0, 0), (0, F_pad - F)))
        b2c = jnp.pad(b2c, ((0, 0), (0, F_pad - F)))

    return {"w1": w1c, "b1": b1c, "w2": w2c, "b2": b2c,
            "fea_size": F, "fea_pad": F_pad}


def fft_encoder(x, params, *, tk=640):
    """Forward pass. `x` is passed as-is (cast happens in-kernel)."""
    B, K = x.shape                    # K == 2560
    w1c, b1c, w2c, b2c = params["w1"], params["b1"], params["w2"], params["b2"]
    H = w1c.shape[1]                  # 512
    F = params["fea_size"]
    F_pad = params["fea_pad"]
    assert K % tk == 0, (K, tk)
    n_k = K // tk

    out = pl.pallas_call(
        fft_encoder_kernel,
        out_shape=jax.ShapeDtypeStruct((B, F_pad), x.dtype),
        grid_spec=pltpu.PrefetchScalarGridSpec(
            num_scalar_prefetch=0,
            grid=(n_k,),
            in_specs=[
                pl.BlockSpec((B, tk), lambda k: (0, k)),      # x tile (streamed)
                pl.BlockSpec((tk, H), lambda k: (k, 0)),      # W1 tile (streamed)
                pl.BlockSpec((1, H), lambda k: (0, 0)),       # b1 (resident)
                pl.BlockSpec((H, F_pad), lambda k: (0, 0)),   # W2 (resident)
                pl.BlockSpec((1, F_pad), lambda k: (0, 0)),   # b2 (resident)
            ],
            out_specs=pl.BlockSpec((B, F_pad), lambda k: (0, 0)),
            scratch_shapes=[pltpu.VMEM((B, H), jnp.float32)],
        ),
        compiler_params=pltpu.CompilerParams(
            dimension_semantics=("arbitrary",),
        ),
    )(x, w1c, b1c, w2c, b2c)

    return out[:, :F] if F_pad != F else out


def reference_forward(x, w1, b1, w2, b2, compute_dtype=jnp.bfloat16):
    """Pure-JAX reference using the same bf16/f32 mixed-precision recipe."""
    xc = x.astype(compute_dtype)
    w1c = w1.astype(compute_dtype)
    w2c = w2.astype(compute_dtype)
    h = jnp.dot(xc, w1c, preferred_element_type=jnp.float32)
    h = jnp.maximum(h + b1.reshape(1, -1).astype(jnp.float32), 0.0)
    y = jnp.dot(h.astype(compute_dtype), w2c, preferred_element_type=jnp.float32)
    y = jnp.maximum(y + b2.reshape(1, -1).astype(jnp.float32), 0.0)
    return y.astype(x.dtype)


if __name__ == "__main__":
    B = 8
    IN = 2560
    HID = 512
    FEA = 128  # fea_size

    key = jax.random.PRNGKey(0)
    kx, kw1, kb1, kw2, kb2 = jax.random.split(key, 5)

    x = jax.random.normal(kx, (B, IN), dtype=jnp.float32)
    # Deterministic synthetic parameters (Linear-like scale).
    w1 = jax.random.normal(kw1, (IN, HID), dtype=jnp.float32) * (1.0 / jnp.sqrt(IN))
    b1 = jax.random.normal(kb1, (1, HID), dtype=jnp.float32) * 0.01
    w2 = jax.random.normal(kw2, (HID, FEA), dtype=jnp.float32) * (1.0 / jnp.sqrt(HID))
    b2 = jax.random.normal(kb2, (1, FEA), dtype=jnp.float32) * 0.01

    # One-time weight prep ("module init"): bf16 cast + lane-dense padding.
    params = jax.tree.map(jax.block_until_ready,
                          prepare_fft_encoder_params(w1, b1, w2, b2))

    out = fft_encoder(x, params)
    out = jax.block_until_ready(out)

    ref = reference_forward(x, w1, b1, w2, b2)
    assert out.shape == (B, FEA)
    assert jnp.allclose(out, ref, atol=2e-2, rtol=2e-2)
    # Looser sanity check against the pure-f32 PyTorch-equivalent path.
    ref_f32 = reference_forward(x, w1, b1, w2, b2, compute_dtype=jnp.float32)
    assert jnp.allclose(out, ref_f32, atol=1e-1, rtol=1e-1)

    print("KERNEL_OK")
</pallas_src>

<mosaic_0001>
module attributes {stable_mosaic.version = 11 : i64} {
  func.func @fft_encoder_kernel(%arg0: i32, %arg1: memref<8x640xf32, #tpu.memory_space<vmem>>, %arg2: memref<640x512xbf16, #tpu.memory_space<vmem>>, %arg3: memref<1x512xf32, #tpu.memory_space<vmem>>, %arg4: memref<512x128xbf16, #tpu.memory_space<vmem>>, %arg5: memref<1x128xf32, #tpu.memory_space<vmem>>, %arg6: memref<8x128xf32, #tpu.memory_space<vmem>>, %arg7: memref<8x512xf32, #tpu.memory_space<vmem>>) attributes {dimension_semantics = [#tpu.dimension_semantics<arbitrary>], iteration_bounds = array<i64: 4>, scalar_prefetch = 0 : i64, scratch_operands = 1 : i64, tpu.core_type = #tpu.core_type<tc>, window_params = [{transform_indices = @transform_0, window_bounds = array<i64: 8, 640>}, {transform_indices = @transform_1, window_bounds = array<i64: 640, 512>}, {pipeline_mode = #tpu.pipeline_mode<synchronous>, transform_indices = @transform_2, window_bounds = array<i64: 1, 512>}, {pipeline_mode = #tpu.pipeline_mode<synchronous>, transform_indices = @transform_3, window_bounds = array<i64: 512, 128>}, {pipeline_mode = #tpu.pipeline_mode<synchronous>, transform_indices = @transform_4, window_bounds = array<i64: 1, 128>}, {pipeline_mode = #tpu.pipeline_mode<synchronous>, transform_indices = @transform_5, window_bounds = array<i64: 8, 128>}]} {
    %c0_i32 = arith.constant 0 : i32
    %0 = arith.cmpi eq, %arg0, %c0_i32 : i32
    %1 = arith.extui %0 : i1 to i32
    %c0_i32_0 = arith.constant 0 : i32
    %2 = arith.cmpi ne, %1, %c0_i32_0 : i32
    scf.if %2 {
      %cst_9 = arith.constant 0.000000e+00 : f32
      %13 = vector.broadcast %cst_9 : f32 to vector<8x512xf32>
      %c0_10 = arith.constant 0 : index
      %c0_11 = arith.constant 0 : index
      %14 = vector.load %arg7[%c0_10, %c0_11] : memref<8x512xf32, #tpu.memory_space<vmem>>, vector<8x512xf32>
      tpu.vector_store %arg7[%c0_10, %c0_11], %13 {strides = array<i32>} : memref<8x512xf32, #tpu.memory_space<vmem>>, vector<8x512xf32>,
    } else {
    }
    %c0 = arith.constant 0 : index
    %c0_1 = arith.constant 0 : index
    %3 = vector.load %arg7[%c0, %c0_1] : memref<8x512xf32, #tpu.memory_space<vmem>>, vector<8x512xf32>
    %c0_2 = arith.constant 0 : index
    %c0_3 = arith.constant 0 : index
    %4 = vector.load %arg1[%c0_2, %c0_3] : memref<8x640xf32, #tpu.memory_space<vmem>>, vector<8x640xf32>
    %5 = arith.truncf %4 : vector<8x640xf32> to vector<8x640xbf16>
    %c0_4 = arith.constant 0 : index
    %c0_5 = arith.constant 0 : index
    %6 = vector.load %arg2[%c0_4, %c0_5] : memref<640x512xbf16, #tpu.memory_space<vmem>>, vector<640x512xbf16>
    %cst = arith.constant dense<0.000000e+00> : vector<8x512xf32>
    %7 = tpu.matmul %5, %6, %cst {dimension_numbers = #tpu.dot_dimension_numbers<[1], [0], [0], [1], [0, 0, 1, 1], [], []>} : vector<8x640xbf16>, vector<640x512xbf16>, vector<8x512xf32> -> vector<8x512xf32>
    %8 = arith.addf %3, %7 : vector<8x512xf32>
    %c0_6 = arith.constant 0 : index
    %c0_7 = arith.constant 0 : index
    %9 = vector.load %arg7[%c0_6, %c0_7] : memref<8x512xf32, #tpu.memory_space<vmem>>, vector<8x512xf32>
    tpu.vector_store %arg7[%c0_6, %c0_7], %8 {strides = array<i32>} : memref<8x512xf32, #tpu.memory_space<vmem>>, vector<8x512xf32>,
    %c3_i32 = arith.constant 3 : i32
    %10 = arith.cmpi eq, %arg0, %c3_i32 : i32
    %11 = arith.extui %10 : i1 to i32
    %c0_i32_8 = arith.constant 0 : i32
    %12 = arith.cmpi ne, %11, %c0_i32_8 : i32
    scf.if %12 {
      %c0_9 = arith.constant 0 : index
      %c0_10 = arith.constant 0 : index
      %13 = vector.load %arg7[%c0_9, %c0_10] : memref<8x512xf32, #tpu.memory_space<vmem>>, vector<8x512xf32>
      %c0_11 = arith.constant 0 : index
      %c0_12 = arith.constant 0 : index
      %14 = vector.load %arg3[%c0_11, %c0_12] : memref<1x512xf32, #tpu.memory_space<vmem>>, vector<1x512xf32>
      %15 = vector.broadcast %14 : vector<1x512xf32> to vector<8x512xf32>
      %16 = arith.addf %13, %15 : vector<8x512xf32>
      %cst_13 = arith.constant 0.000000e+00 : f32
      %17 = vector.broadcast %cst_13 : f32 to vector<8x512xf32>
      %18 = arith.maximumf %16, %17 : vector<8x512xf32>
      %19 = arith.truncf %18 : vector<8x512xf32> to vector<8x512xbf16>
      %c0_14 = arith.constant 0 : index
      %c0_15 = arith.constant 0 : index
      %20 = vector.load %arg4[%c0_14, %c0_15] : memref<512x128xbf16, #tpu.memory_space<vmem>>, vector<512x128xbf16>
      %cst_16 = arith.constant dense<0.000000e+00> : vector<8x128xf32>
      %21 = tpu.matmul %19, %20, %cst_16 {dimension_numbers = #tpu.dot_dimension_numbers<[1], [0], [0], [1], [0, 0, 1, 1], [], []>} : vector<8x512xbf16>, vector<512x128xbf16>, vector<8x128xf32> -> vector<8x128xf32>
      %c0_17 = arith.constant 0 : index
      %c0_18 = arith.constant 0 : index
      %22 = vector.load %arg5[%c0_17, %c0_18] : memref<1x128xf32, #tpu.memory_space<vmem>>, vector<1x128xf32>
      %23 = vector.broadcast %22 : vector<1x128xf32> to vector<8x128xf32>
      %24 = arith.addf %21, %23 : vector<8x128xf32>
      %cst_19 = arith.constant 0.000000e+00 : f32
      %25 = vector.broadcast %cst_19 : f32 to vector<8x128xf32>
      %26 = arith.maximumf %24, %25 : vector<8x128xf32>
      %c0_20 = arith.constant 0 : index
      %c0_21 = arith.constant 0 : index
      %27 = vector.load %arg6[%c0_20, %c0_21] : memref<8x128xf32, #tpu.memory_space<vmem>>, vector<8x128xf32>
      tpu.vector_store %arg6[%c0_20, %c0_21], %26 {strides = array<i32>} : memref<8x128xf32, #tpu.memory_space<vmem>>, vector<8x128xf32>,
    } else {
    }
    return
  }
  func.func @transform_0(%arg0: i32) -> (i32, i32) {
    %c0_i32 = arith.constant 0 : i32
    %c0_i32_0 = arith.constant 0 : i32
    return %c0_i32, %arg0 : i32, i32
  }
  func.func @transform_1(%arg0: i32) -> (i32, i32) {
    %c0_i32 = arith.constant 0 : i32
    %c0_i32_0 = arith.constant 0 : i32
    return %arg0, %c0_i32 : i32, i32
  }
  func.func @transform_2(%arg0: i32) -> (i32, i32) {
    %c0_i32 = arith.constant 0 : i32
    %c0_i32_0 = arith.constant 0 : i32
    %c0_i32_1 = arith.constant 0 : i32
    return %c0_i32, %c0_i32_0 : i32, i32
  }
  func.func @transform_3(%arg0: i32) -> (i32, i32) {
    %c0_i32 = arith.constant 0 : i32
    %c0_i32_0 = arith.constant 0 : i32
    %c0_i32_1 = arith.constant 0 : i32
    return %c0_i32, %c0_i32_0 : i32, i32
  }
  func.func @transform_4(%arg0: i32) -> (i32, i32) {
    %c0_i32 = arith.constant 0 : i32
    %c0_i32_0 = arith.constant 0 : i32
    %c0_i32_1 = arith.constant 0 : i32
    return %c0_i32, %c0_i32_0 : i32, i32
  }
  func.func @transform_5(%arg0: i32) -> (i32, i32) {
    %c0_i32 = arith.constant 0 : i32
    %c0_i32_0 = arith.constant 0 : i32
    %c0_i32_1 = arith.constant 0 : i32
    return %c0_i32, %c0_i32_0 : i32, i32
  }
}

</mosaic_0001>

<llo_original>
// kernel: tpu_custom_call.1
$region0: #{tpu_custom_call.1}
  #allocation0 [shape = 'u32[]', space=smem, size = 0x4, offset = 0x4, fixed_abs, tag = 'smem constant byte address 0x4 - core index']
  #allocation1 [shape = 'u32[144,128]{1,0:T(1,128)}', space=vmem, size = 0x12000, scoped, tag = 'internal scratch']
  #allocation2 [shape = 'f32[8,512]{1,0:T(8,128)}', space=vmem, size = 0x4000, scoped, tag = 'scratch operand']
  %s0 = inlined_call_operand.hbm [shape: f32[8,2560], index: 0, kind: input, shape index: {}]
  %s1 = inlined_call_operand.hbm [shape: bf16[2560,512], index: 1, kind: input, shape index: {}]
  %s2 = inlined_call_operand.hbm [shape: f32[1,512], index: 2, kind: input, shape index: {}]
  %s3 = inlined_call_operand.hbm [shape: bf16[512,128], index: 3, kind: input, shape index: {}]
  %s4 = inlined_call_operand.hbm [shape: f32[1,128], index: 4, kind: input, shape index: {}]
  %s5 = inlined_call_operand.hbm [shape: f32[8,128], index: 5, kind: output, shape index: {}]
  %s6 = sld [smem:[#allocation0]]
  $region81: #{tpu_custom_call.1} parent=0
    _
  %s8 = ssub.s32 1, %s6
  %s9 = scalar_select 0, %s8, %s6
  $region1: #{tpu_custom_call.1} parent=0
    #allocation3 [shape = 'u8[40960]{0}', space=vmem, size = 0xa000, scoped, tag = 'input window, operand 0']
    #allocation4 [shape = 's32[2]{0}', space=sflag, size = 0x8, scoped, tag = 'scoped memory for tpu_custom_call.1']
    #allocation5 [shape = 's32[2]{0}', space=sflag, size = 0x8, scoped, tag = 'scoped memory for tpu_custom_call.1']
    #allocation6 [shape = 'u8[1310720]{0}', space=vmem, size = 0x140000, scoped, tag = 'input window, operand 1']
    #allocation7 [shape = 's32[2]{0}', space=sflag, size = 0x8, scoped, tag = 'scoped memory for tpu_custom_call.1']
    #allocation8 [shape = 'u8[2048]{0}', space=vmem, size = 0x800, scoped, tag = 'input window, operand 2, single buffered']
    #allocation9 [shape = 'u8[131072]{0}', space=vmem, size = 0x20000, scoped, tag = 'input window, operand 3, single buffered']
    #allocation10 [shape = 's32[1]{0}', space=sflag, size = 0x4, scoped, tag = 'scoped memory for tpu_custom_call.1']
    #allocation11 [shape = 'u8[512]{0}', space=vmem, size = 0x400, scoped, tag = 'input window, operand 4, single buffered']
    #allocation12 [shape = 'u8[4096]{0}', space=vmem, size = 0x1000, scoped, tag = 'output window, operand 0, single buffered']
    %10 = vsyncpa [#allocation4], 0
    %s11 = scalar_lea.sflag [#allocation4], 1
    %12 = vsyncpa %s11, 0
    %13 = vsyncpa [#allocation7], 0
    %s14 = scalar_lea.sflag [#allocation7], 1
    %15 = vsyncpa %s14, 0
    %16 = vsyncpa [#allocation10], 0
    %17 = vsyncpa [#allocation5], 0
    loop: start=0, step=1, limit=6
    $region2: #{tpu_custom_call.1} parent=1 // loop_pre_header
      _
    $region3: #{tpu_custom_call.1} parent=1 // loop_header
      %s19 = sphi 0, %s23
      %p20 = scmp.ge.s32.totalorder %s19, 6
      %s29 = sphi 0, %s31
      %s32 = sphi 0, %s29
      %s33 = sphi 0, %s32
      %s49 = sphi 0, %s33
      %s55 = sphi 0, %s57
      %s58 = sphi 0, %s55
      %s59 = sphi 0, %s58
      %s75 = sphi 0, %s59
      %s79 = sphi 0, %s79
      %s81 = sphi 0, %s79
      %s82 = sphi 0, %s81
      %s96 = sphi 0, %s82
      %s100 = sphi 0, %s100
      %s102 = sphi 0, %s100
      %s103 = sphi 0, %s102
      %s117 = sphi 0, %s103
      %s121 = sphi 0, %s121
      %s123 = sphi 0, %s121
      %s124 = sphi 0, %s123
      %s138 = sphi 0, %s124
      %s142 = sphi 0, %s142
      %s144 = sphi 0, %s142
      %s145 = sphi 0, %s144
      %s159 = sphi 0, %s145
    $region4: #{tpu_custom_call.1} parent=1 // loop_header_branch
      %22 = sbr.rel (%p20) target = $region8
    $region5: #{tpu_custom_call.1} parent=1 // loop_body
      %s24 = ssub.s32 %s19, 1
      %s25 = ssub.s32 %s19, 2
      %s26 = sadd.s32 %s19, 1
      %s27 = ssub.s32 %s19, %s26
      %p28 = scmp.eq.s32.totalorder %s27, 0
      %s30 = sadd.s32 %s29, 1
      %s31 = scalar_select %p28, %s29, %s30
      %p34 = pneg %p28
      %p35 = scmp.eq.s32.totalorder %s19, 3
      %p36 = por %p34, %p35
      %p37 = scmp.ne.s32.totalorder %s29, %s32
      %p38 = scmp.eq.s32.totalorder %s19, 0
      %p39 = por %p37, %p38
      %p40 = scmp.ne.s32.totalorder %s29, %s32
      %p41 = scmp.eq.s32.totalorder %s24, 3
      %p42 = por %p40, %p41
      %p43 = scmp.ne.s32.totalorder %s32, %s33
      %p44 = scmp.eq.s32.totalorder %s24, 0
      %p45 = por %p43, %p44
      %p46 = scmp.ne.s32.totalorder %s32, %s33
      %p47 = scmp.eq.s32.totalorder %s25, 3
      %p48 = por %p46, %p47
      %p50 = scmp.ne.s32.totalorder %s33, %s49
      %p51 = scmp.eq.s32.totalorder %s25, 0
      %p52 = por %p50, %p51
      %s53 = ssub.s32 %s19, %s26
      %p54 = scmp.eq.s32.totalorder %s53, 0
      %s56 = sadd.s32 %s55, 1
      %s57 = scalar_select %p54, %s55, %s56
      %p60 = pneg %p54
      %p61 = scmp.eq.s32.totalorder %s19, 3
      %p62 = por %p60, %p61
      %p63 = scmp.ne.s32.totalorder %s55, %s58
      %p64 = scmp.eq.s32.totalorder %s19, 0
      %p65 = por %p63, %p64
      %p66 = scmp.ne.s32.totalorder %s55, %s58
      %p67 = scmp.eq.s32.totalorder %s24, 3
      %p68 = por %p66, %p67
      %p69 = scmp.ne.s32.totalorder %s58, %s59
      %p70 = scmp.eq.s32.totalorder %s24, 0
      %p71 = por %p69, %p70
      %p72 = scmp.ne.s32.totalorder %s58, %s59
      %p73 = scmp.eq.s32.totalorder %s25, 3
      %p74 = por %p72, %p73
      %p76 = scmp.ne.s32.totalorder %s59, %s75
      %p77 = scmp.eq.s32.totalorder %s25, 0
      %p78 = por %p76, %p77
      %s80 = sadd.s32 %s79, 1
      %p83 = scmp.eq.s32.totalorder %s19, 3
      %p84 = scmp.ne.s32.totalorder %s79, %s81
      %p85 = scmp.eq.s32.totalorder %s19, 0
      %p86 = por %p84, %p85
      %p87 = scmp.ne.s32.totalorder %s79, %s81
      %p88 = scmp.eq.s32.totalorder %s24, 3
      %p89 = por %p87, %p88
      %p90 = scmp.ne.s32.totalorder %s81, %s82
      %p91 = scmp.eq.s32.totalorder %s24, 0
      %p92 = por %p90, %p91
      %p93 = scmp.ne.s32.totalorder %s81, %s82
      %p94 = scmp.eq.s32.totalorder %s25, 3
      %p95 = por %p93, %p94
      %p97 = scmp.ne.s32.totalorder %s82, %s96
      %p98 = scmp.eq.s32.totalorder %s25, 0
      %p99 = por %p97, %p98
      %s101 = sadd.s32 %s100, 1
      %p104 = scmp.eq.s32.totalorder %s19, 3
      %p105 = scmp.ne.s32.totalorder %s100, %s102
      %p106 = scmp.eq.s32.totalorder %s19, 0
      %p107 = por %p105, %p106
      %p108 = scmp.ne.s32.totalorder %s100, %s102
      %p109 = scmp.eq.s32.totalorder %s24, 3
      %p110 = por %p108, %p109
      %p111 = scmp.ne.s32.totalorder %s102, %s103
      %p112 = scmp.eq.s32.totalorder %s24, 0
      %p113 = por %p111, %p112
      %p114 = scmp.ne.s32.totalorder %s102, %s103
      %p115 = scmp.eq.s32.totalorder %s25, 3
      %p116 = por %p114, %p115
      %p118 = scmp.ne.s32.totalorder %s103, %s117
      %p119 = scmp.eq.s32.totalorder %s25, 0
      %p120 = por %p118, %p119
      %s122 = sadd.s32 %s121, 1
      %p125 = scmp.eq.s32.totalorder %s19, 3
      %p126 = scmp.ne.s32.totalorder %s121, %s123
      %p127 = scmp.eq.s32.totalorder %s19, 0
      %p128 = por %p126, %p127
      %p129 = scmp.ne.s32.totalorder %s121, %s123
      %p130 = scmp.eq.s32.totalorder %s24, 3
      %p131 = por %p129, %p130
      %p132 = scmp.ne.s32.totalorder %s123, %s124
      %p133 = scmp.eq.s32.totalorder %s24, 0
      %p134 = por %p132, %p133
      %p135 = scmp.ne.s32.totalorder %s123, %s124
      %p136 = scmp.eq.s32.totalorder %s25, 3
      %p137 = por %p135, %p136
      %p139 = scmp.ne.s32.totalorder %s124, %s138
      %p140 = scmp.eq.s32.totalorder %s25, 0
      %p141 = por %p139, %p140
      %s143 = sadd.s32 %s142, 1
      %p146 = scmp.eq.s32.totalorder %s19, 3
      %p147 = scmp.ne.s32.totalorder %s142, %s144
      %p148 = scmp.eq.s32.totalorder %s19, 0
      %p149 = por %p147, %p148
      %p150 = scmp.ne.s32.totalorder %s142, %s144
      %p151 = scmp.eq.s32.totalorder %s24, 3
      %p152 = por %p150, %p151
      %p153 = scmp.ne.s32.totalorder %s144, %s145
      %p154 = scmp.eq.s32.totalorder %s24, 0
      %p155 = por %p153, %p154
      %p156 = scmp.ne.s32.totalorder %s144, %s145
      %p157 = scmp.eq.s32.totalorder %s25, 3
      %p158 = por %p156, %p157
      %p160 = scmp.ne.s32.totalorder %s145, %s159
      %p161 = scmp.eq.s32.totalorder %s25, 0
      %p162 = por %p160, %p161
      %p163 = scmp.le.s32.totalorder 1, %s19
      %p164 = scmp.lt.s32.totalorder %s19, 5
      %p165 = pnand %p163, %p164
      %p166 = pneg %p165
      // Predicated region
      $region9: #{tpu_custom_call.1} parent=5 // pred_check
        _
      $region10: #{tpu_custom_call.1} parent=5 // pred_check_branch
        %168 = sbr.rel (%p165) target = $region12
      $region11: #{tpu_custom_call.1} parent=5 // pred_region
        %s169 = ssub.s32 %s19, 1
        // Predicated region
        $region13: #{tpu_custom_call.1} parent=11 // pred_check
          %p170 = pneg %p92
        $region14: #{tpu_custom_call.1} parent=11 // pred_check_branch
          %172 = sbr.rel (%p170) target = $region16
        $region15: #{tpu_custom_call.1} parent=11 // pred_region
          %s174 = ssub.s32 64, 64
          %175 = vsyncadd [#allocation7], %s174
          %s177 = sshll.u32 [#allocation8], 4
          %s178 = int_to_ptr.vmem [resolvable:$true] %s177
          %180 = dma.hbm_to_vmem [thread:$0]  %s2, 64, %s178, [#allocation7]
        $region16: #{tpu_custom_call.1} parent=11 // pred_fallthru
          _
        // Predicated region
        $region17: #{tpu_custom_call.1} parent=11 // pred_check
          %p181 = pneg %p113
        $region18: #{tpu_custom_call.1} parent=11 // pred_check_branch
          %183 = sbr.rel (%p181) target = $region20
        $region19: #{tpu_custom_call.1} parent=11 // pred_region
          %s185 = ssub.s32 4096, 4096
          %186 = vsyncadd [#allocation10], %s185
          %s187 = sshll.u32 [#allocation9], 4
          %s188 = int_to_ptr.vmem [resolvable:$true] %s187
          %193 = dma.hbm_to_vmem [thread:$0]  %s3, 4096, %s188, [#allocation10], 64, 64, 4
        $region20: #{tpu_custom_call.1} parent=11 // pred_fallthru
          _
        // Predicated region
        $region21: #{tpu_custom_call.1} parent=11 // pred_check
          %p194 = pneg %p134
        $region22: #{tpu_custom_call.1} parent=11 // pred_check_branch
          %196 = sbr.rel (%p194) target = $region24
        $region23: #{tpu_custom_call.1} parent=11 // pred_region
          %s198 = ssub.s32 16, 16
          %199 = vsyncadd [#allocation10], %s198
          %s201 = sshll.u32 [#allocation11], 4
          %s202 = int_to_ptr.vmem [resolvable:$true] %s201
          %204 = dma.hbm_to_vmem [thread:$0]  %s4, 16, %s202, [#allocation10]
        $region24: #{tpu_custom_call.1} parent=11 // pred_fallthru
          _
      $region12: #{tpu_custom_call.1} parent=5 // pred_fallthru
        _
      %p205 = scmp.lt.s32.totalorder %s19, 4
      // Predicated region
      $region25: #{tpu_custom_call.1} parent=5 // pred_check
        %p206 = pneg %p205
      $region26: #{tpu_custom_call.1} parent=5 // pred_check_branch
        %208 = sbr.rel (%p206) target = $region28
      $region27: #{tpu_custom_call.1} parent=5 // pred_region
        // Predicated region
        $region29: #{tpu_custom_call.1} parent=27 // pred_check
          %p209 = pneg %p39
        $region30: #{tpu_custom_call.1} parent=27 // pred_check_branch
          %211 = sbr.rel (%p209) target = $region32
        $region31: #{tpu_custom_call.1} parent=27 // pred_region
          %s212 = sand.u32 %s29, 1
          %s213 = scalar_lea.sflag [#allocation4], %s212
          %s214 = sand.u32 %s29, 1
          %s215 = smul.addr %s214, 40
          %s216 = scalar_lea.vmem [#allocation3], %s215
          %s217 = smul.u32 5, %s19
          %s219 = ssub.s32 640, 640
          %220 = vsyncadd %s213, %s219
          %s221 = smul.addr %s217, 128
          %s222 = scalar_lea.hbm %s0, %s221
          %s224 = sshll.u32 %s216, 4
          %s225 = int_to_ptr.vmem [resolvable:$true] %s224
          %227 = dma.hbm_to_vmem [thread:$0]  %s222, 640, %s225, %s213
        $region32: #{tpu_custom_call.1} parent=27 // pred_fallthru
          _
        // Predicated region
        $region33: #{tpu_custom_call.1} parent=27 // pred_check
          %p228 = pneg %p65
        $region34: #{tpu_custom_call.1} parent=27 // pred_check_branch
          %230 = sbr.rel (%p228) target = $region36
        $region35: #{tpu_custom_call.1} parent=27 // pred_region
          %s231 = sand.u32 %s19, 1
          %s232 = scalar_lea.sflag [#allocation7], %s231
          %s233 = sand.u32 %s55, 1
          %s234 = smul.addr %s233, 1280
          %s235 = scalar_lea.vmem [#allocation6], %s234
          %s236 = smul.u32 80, %s19
          %s238 = ssub.s32 20480, 20480
          %239 = vsyncadd %s232, %s238
          %s240 = smul.addr %s236, 4
          %s241 = smul.addr %s240, 64
          %s242 = scalar_lea.hbm %s1, %s241
          %s243 = sshll.u32 %s235, 4
          %s244 = int_to_ptr.vmem [resolvable:$true] %s243
          %249 = dma.hbm_to_vmem [thread:$0]  %s242, 20480, %s244, %s232, 256, 256, 16
        $region36: #{tpu_custom_call.1} parent=27 // pred_fallthru
          _
      $region28: #{tpu_custom_call.1} parent=5 // pred_fallthru
        _
      %p250 = scmp.le.s32.totalorder 1, %s19
      %p251 = scmp.lt.s32.totalorder %s19, 5
      %p252 = pnand %p250, %p251
      %p253 = pneg %p252
      // Predicated region
      $region37: #{tpu_custom_call.1} parent=5 // pred_check
        _
      $region38: #{tpu_custom_call.1} parent=5 // pred_check_branch
        %255 = sbr.rel (%p252) target = $region40
      $region39: #{tpu_custom_call.1} parent=5 // pred_region
        %s256 = ssub.s32 %s19, 1
        %s257 = sand.u32 %s32, 1
        %s258 = scalar_lea.sflag [#allocation4], %s257
        %s259 = sand.u32 %s32, 1
        %s260 = smul.addr %s259, 40
        %s261 = scalar_lea.vmem [#allocation3], %s260
        // Predicated region
        $region41: #{tpu_custom_call.1} parent=39 // pred_check
          %p262 = pneg %p45
        $region42: #{tpu_custom_call.1} parent=39 // pred_check_branch
          %264 = sbr.rel (%p262) target = $region44
        $region43: #{tpu_custom_call.1} parent=39 // pred_region
          %265 = dma.done %s258, 640
        $region44: #{tpu_custom_call.1} parent=39 // pred_fallthru
          _
        %s266 = sand.u32 %s24, 1
        %s267 = scalar_lea.sflag [#allocation7], %s266
        %s268 = sand.u32 %s58, 1
        %s269 = smul.addr %s268, 1280
        %s270 = scalar_lea.vmem [#allocation6], %s269
        // Predicated region
        $region45: #{tpu_custom_call.1} parent=39 // pred_check
          %p271 = pneg %p71
        $region46: #{tpu_custom_call.1} parent=39 // pred_check_branch
          %273 = sbr.rel (%p271) target = $region48
        $region47: #{tpu_custom_call.1} parent=39 // pred_region
          %274 = dma.done %s267, 20480
        $region48: #{tpu_custom_call.1} parent=39 // pred_fallthru
          _
        // Predicated region
        $region49: #{tpu_custom_call.1} parent=39 // pred_check
          %p275 = pneg %p92
        $region50: #{tpu_custom_call.1} parent=39 // pred_check_branch
          %277 = sbr.rel (%p275) target = $region52
        $region51: #{tpu_custom_call.1} parent=39 // pred_region
          %278 = dma.done [#allocation7], 64
        $region52: #{tpu_custom_call.1} parent=39 // pred_fallthru
          _
        // Predicated region
        $region53: #{tpu_custom_call.1} parent=39 // pred_check
          %p279 = pneg %p113
        $region54: #{tpu_custom_call.1} parent=39 // pred_check_branch
          %281 = sbr.rel (%p279) target = $region56
        $region55: #{tpu_custom_call.1} parent=39 // pred_region
          %282 = dma.done [#allocation10], 4096
        $region56: #{tpu_custom_call.1} parent=39 // pred_fallthru
          _
        // Predicated region
        $region57: #{tpu_custom_call.1} parent=39 // pred_check
          %p283 = pneg %p134
        $region58: #{tpu_custom_call.1} parent=39 // pred_check_branch
          %285 = sbr.rel (%p283) target = $region60
        $region59: #{tpu_custom_call.1} parent=39 // pred_region
          %286 = dma.done [#allocation10], 16
        $region60: #{tpu_custom_call.1} parent=39 // pred_fallthru
          _
        %s287 = sand.u32 %s32, 1
        %s288 = scalar_lea.sflag [#allocation4], %s287
        %s289 = sand.u32 %s32, 1
        %s290 = smul.addr %s289, 40
        %s291 = scalar_lea.vmem [#allocation3], %s290
        %p292 = pneg %p45
        %p293 = pneg %p42
        %s294 = sand.u32 %s24, 1
        %s295 = scalar_lea.sflag [#allocation7], %s294
        %s296 = sand.u32 %s58, 1
        %s297 = smul.addr %s296, 1280
        %s298 = scalar_lea.vmem [#allocation6], %s297
        %p299 = pneg %p71
        %p300 = pneg %p68
        %p301 = pneg %p92
        %p302 = pneg %p89
        %p303 = pneg %p113
        %p304 = pneg %p110
        %p305 = pneg %p134
        %p306 = pneg %p131
        %p307 = pneg %p155
        %p308 = pneg %p152
        %s309 = smul.u32 5, %s24
        %s310 = smul.u32 80, %s24
        %p312 = scmp.eq.s32.totalorder %s24, 0
        // Predicated region
        $region61: #{tpu_custom_call.1} parent=39 // pred_check
          %p313 = pneg %p312
        $region62: #{tpu_custom_call.1} parent=39 // pred_check_branch
          %315 = sbr.rel (%p313) target = $region64
        $region63: #{tpu_custom_call.1} parent=39 // pred_region
          %316 = vst [vmem:[#allocation2] sm:$0xff] 0.0
          %317 = vst [vmem:[#allocation2 + $0x8] sm:$0xff] 0.0
          %318 = vst [vmem:[#allocation2 + $0x10] sm:$0xff] 0.0
          %319 = vst [vmem:[#allocation2 + $0x18] sm:$0xff] 0.0
        $region64: #{tpu_custom_call.1} parent=39 // pred_fallthru
          _
        %v320 = vld [vmem:[#allocation2] sm:$0xff]
        %v321 = vld [vmem:[#allocation2 + $0x8] sm:$0xff]
        %v322 = vld [vmem:[#allocation2 + $0x10] sm:$0xff]
        %v323 = vld [vmem:[#allocation2 + $0x18] sm:$0xff]
        %v324 = vld [vmem:[%s261] sm:$0xff]
        %v325 = vld [vmem:[%s261 + $0x8] sm:$0xff]
        %v326 = vld [vmem:[%s261 + $0x10] sm:$0xff]
        %v327 = vld [vmem:[%s261 + $0x18] sm:$0xff]
        %v328 = vld [vmem:[%s261 + $0x20] sm:$0xff]
        %v329 = vpack.c.bf16 %v324, %v324
        %v330 = vpack.c.bf16 %v325, %v325
        %v331 = vpack.c.bf16 %v326, %v326
        %v332 = vpack.c.bf16 %v327, %v327
        %v333 = vpack.c.bf16 %v328, %v328
        %v334 = vld [vmem:[%s270] sm:$0xff]
        %v335 = vld [vmem:[%s270 + $0x8] sm:$0xff]
        %v336 = vld [vmem:[%s270 + $0x10] sm:$0xff]
        %v337 = vld [vmem:[%s270 + $0x18] sm:$0xff]
        %v338 = vld [vmem:[%s270 + $0x20] sm:$0xff]
        %v339 = vld [vmem:[%s270 + $0x28] sm:$0xff]
        %v340 = vld [vmem:[%s270 + $0x30] sm:$0xff]
        %v341 = vld [vmem:[%s270 + $0x38] sm:$0xff]
        %v342 = vld [vmem:[%s270 + $0x40] sm:$0xff]
        %v343 = vld [vmem:[%s270 + $0x48] sm:$0xff]
        %v344 = vld [vmem:[%s270 + $0x50] sm:$0xff]
        %v345 = vld [vmem:[%s270 + $0x58] sm:$0xff]
        %v346 = vld [vmem:[%s270 + $0x60] sm:$0xff]
        %v347 = vld [vmem:[%s270 + $0x68] sm:$0xff]
        %v348 = vld [vmem:[%s270 + $0x70] sm:$0xff]
        %v349 = vld [vmem:[%s270 + $0x78] sm:$0xff]
        %v350 = vld [vmem:[%s270 + $0x80] sm:$0xff]
        %v351 = vld [vmem:[%s270 + $0x88] sm:$0xff]
        %v352 = vld [vmem:[%s270 + $0x90] sm:$0xff]
        %v353 = vld [vmem:[%s270 + $0x98] sm:$0xff]
        %v354 = vld [vmem:[%s270 + $0xa0] sm:$0xff]
        %v355 = vld [vmem:[%s270 + $0xa8] sm:$0xff]
        %v356 = vld [vmem:[%s270 + $0xb0] sm:$0xff]
        %v357 = vld [vmem:[%s270 + $0xb8] sm:$0xff]
        %v358 = vld [vmem:[%s270 + $0xc0] sm:$0xff]
        %v359 = vld [vmem:[%s270 + $0xc8] sm:$0xff]
        %v360 = vld [vmem:[%s270 + $0xd0] sm:$0xff]
        %v361 = vld [vmem:[%s270 + $0xd8] sm:$0xff]
        %v362 = vld [vmem:[%s270 + $0xe0] sm:$0xff]
        %v363 = vld [vmem:[%s270 + $0xe8] sm:$0xff]
        %v364 = vld [vmem:[%s270 + $0xf0] sm:$0xff]
        %v365 = vld [vmem:[%s270 + $0xf8] sm:$0xff]
        %v366 = vld [vmem:[%s270 + $0x100] sm:$0xff]
        %v367 = vld [vmem:[%s270 + $0x108] sm:$0xff]
        %v368 = vld [vmem:[%s270 + $0x110] sm:$0xff]
        %v369 = vld [vmem:[%s270 + $0x118] sm:$0xff]
        %v370 = vld [vmem:[%s270 + $0x120] sm:$0xff]
        %v371 = vld [vmem:[%s270 + $0x128] sm:$0xff]
        %v372 = vld [vmem:[%s270 + $0x130] sm:$0xff]
        %v373 = vld [vmem:[%s270 + $0x138] sm:$0xff]
        %v374 = vld [vmem:[%s270 + $0x140] sm:$0xff]
        %v375 = vld [vmem:[%s270 + $0x148] sm:$0xff]
        %v376 = vld [vmem:[%s270 + $0x150] sm:$0xff]
        %v377 = vld [vmem:[%s270 + $0x158] sm:$0xff]
        %v378 = vld [vmem:[%s270 + $0x160] sm:$0xff]
        %v379 = vld [vmem:[%s270 + $0x168] sm:$0xff]
        %v380 = vld [vmem:[%s270 + $0x170] sm:$0xff]
        %v381 = vld [vmem:[%s270 + $0x178] sm:$0xff]
        %v382 = vld [vmem:[%s270 + $0x180] sm:$0xff]
        %v383 = vld [vmem:[%s270 + $0x188] sm:$0xff]
        %v384 = vld [vmem:[%s270 + $0x190] sm:$0xff]
        %v385 = vld [vmem:[%s270 + $0x198] sm:$0xff]
        %v386 = vld [vmem:[%s270 + $0x1a0] sm:$0xff]
        %v387 = vld [vmem:[%s270 + $0x1a8] sm:$0xff]
        %v388 = vld [vmem:[%s270 + $0x1b0] sm:$0xff]
        %v389 = vld [vmem:[%s270 + $0x1b8] sm:$0xff]
        %v390 = vld [vmem:[%s270 + $0x1c0] sm:$0xff]
        %v391 = vld [vmem:[%s270 + $0x1c8] sm:$0xff]
        %v392 = vld [vmem:[%s270 + $0x1d0] sm:$0xff]
        %v393 = vld [vmem:[%s270 + $0x1d8] sm:$0xff]
        %v394 = vld [vmem:[%s270 + $0x1e0] sm:$0xff]
        %v395 = vld [vmem:[%s270 + $0x1e8] sm:$0xff]
        %v396 = vld [vmem:[%s270 + $0x1f0] sm:$0xff]
        %v397 = vld [vmem:[%s270 + $0x1f8] sm:$0xff]
        %v398 = vld [vmem:[%s270 + $0x200] sm:$0xff]
        %v399 = vld [vmem:[%s270 + $0x208] sm:$0xff]
        %v400 = vld [vmem:[%s270 + $0x210] sm:$0xff]
        %v401 = vld [vmem:[%s270 + $0x218] sm:$0xff]
        %v402 = vld [vmem:[%s270 + $0x220] sm:$0xff]
        %v403 = vld [vmem:[%s270 + $0x228] sm:$0xff]
        %v404 = vld [vmem:[%s270 + $0x230] sm:$0xff]
        %v405 = vld [vmem:[%s270 + $0x238] sm:$0xff]
        %v406 = vld [vmem:[%s270 + $0x240] sm:$0xff]
        %v407 = vld [vmem:[%s270 + $0x248] sm:$0xff]
        %v408 = vld [vmem:[%s270 + $0x250] sm:$0xff]
        %v409 = vld [vmem:[%s270 + $0x258] sm:$0xff]
        %v410 = vld [vmem:[%s270 + $0x260] sm:$0xff]
        %v411 = vld [vmem:[%s270 + $0x268] sm:$0xff]
        %v412 = vld [vmem:[%s270 + $0x270] sm:$0xff]
        %v413 = vld [vmem:[%s270 + $0x278] sm:$0xff]
        %v414 = vld [vmem:[%s270 + $0x280] sm:$0xff]
        %v415 = vld [vmem:[%s270 + $0x288] sm:$0xff]
        %v416 = vld [vmem:[%s270 + $0x290] sm:$0xff]
        %v417 = vld [vmem:[%s270 + $0x298] sm:$0xff]
        %v418 = vld [vmem:[%s270 + $0x2a0] sm:$0xff]
        %v419 = vld [vmem:[%s270 + $0x2a8] sm:$0xff]
        %v420 = vld [vmem:[%s270 + $0x2b0] sm:$0xff]
        %v421 = vld [vmem:[%s270 + $0x2b8] sm:$0xff]
        %v422 = vld [vmem:[%s270 + $0x2c0] sm:$0xff]
        %v423 = vld [vmem:[%s270 + $0x2c8] sm:$0xff]
        %v424 = vld [vmem:[%s270 + $0x2d0] sm:$0xff]
        %v425 = vld [vmem:[%s270 + $0x2d8] sm:$0xff]
        %v426 = vld [vmem:[%s270 + $0x2e0] sm:$0xff]
        %v427 = vld [vmem:[%s270 + $0x2e8] sm:$0xff]
        %v428 = vld [vmem:[%s270 + $0x2f0] sm:$0xff]
        %v429 = vld [vmem:[%s270 + $0x2f8] sm:$0xff]
        %v430 = vld [vmem:[%s270 + $0x300] sm:$0xff]
        %v431 = vld [vmem:[%s270 + $0x308] sm:$0xff]
        %v432 = vld [vmem:[%s270 + $0x310] sm:$0xff]
        %v433 = vld [vmem:[%s270 + $0x318] sm:$0xff]
        %v434 = vld [vmem:[%s270 + $0x320] sm:$0xff]
        %v435 = vld [vmem:[%s270 + $0x328] sm:$0xff]
        %v436 = vld [vmem:[%s270 + $0x330] sm:$0xff]
        %v437 = vld [vmem:[%s270 + $0x338] sm:$0xff]
        %v438 = vld [vmem:[%s270 + $0x340] sm:$0xff]
        %v439 = vld [vmem:[%s270 + $0x348] sm:$0xff]
        %v440 = vld [vmem:[%s270 + $0x350] sm:$0xff]
        %v441 = vld [vmem:[%s270 + $0x358] sm:$0xff]
        %v442 = vld [vmem:[%s270 + $0x360] sm:$0xff]
        %v443 = vld [vmem:[%s270 + $0x368] sm:$0xff]
        %v444 = vld [vmem:[%s270 + $0x370] sm:$0xff]
        %v445 = vld [vmem:[%s270 + $0x378] sm:$0xff]
        %v446 = vld [vmem:[%s270 + $0x380] sm:$0xff]
        %v447 = vld [vmem:[%s270 + $0x388] sm:$0xff]
        %v448 = vld [vmem:[%s270 + $0x390] sm:$0xff]
        %v449 = vld [vmem:[%s270 + $0x398] sm:$0xff]
        %v450 = vld [vmem:[%s270 + $0x3a0] sm:$0xff]
        %v451 = vld [vmem:[%s270 + $0x3a8] sm:$0xff]
        %v452 = vld [vmem:[%s270 + $0x3b0] sm:$0xff]
        %v453 = vld [vmem:[%s270 + $0x3b8] sm:$0xff]
        %v454 = vld [vmem:[%s270 + $0x3c0] sm:$0xff]
        %v455 = vld [vmem:[%s270 + $0x3c8] sm:$0xff]
        %v456 = vld [vmem:[%s270 + $0x3d0] sm:$0xff]
        %v457 = vld [vmem:[%s270 + $0x3d8] sm:$0xff]
        %v458 = vld [vmem:[%s270 + $0x3e0] sm:$0xff]
        %v459 = vld [vmem:[%s270 + $0x3e8] sm:$0xff]
        %v460 = vld [vmem:[%s270 + $0x3f0] sm:$0xff]
        %v461 = vld [vmem:[%s270 + $0x3f8] sm:$0xff]
        %v462 = vld [vmem:[%s270 + $0x400] sm:$0xff]
        %v463 = vld [vmem:[%s270 + $0x408] sm:$0xff]
        %v464 = vld [vmem:[%s270 + $0x410] sm:$0xff]
        %v465 = vld [vmem:[%s270 + $0x418] sm:$0xff]
        %v466 = vld [vmem:[%s270 + $0x420] sm:$0xff]
        %v467 = vld [vmem:[%s270 + $0x428] sm:$0xff]
        %v468 = vld [vmem:[%s270 + $0x430] sm:$0xff]
        %v469 = vld [vmem:[%s270 + $0x438] sm:$0xff]
        %v470 = vld [vmem:[%s270 + $0x440] sm:$0xff]
        %v471 = vld [vmem:[%s270 + $0x448] sm:$0xff]
        %v472 = vld [vmem:[%s270 + $0x450] sm:$0xff]
        %v473 = vld [vmem:[%s270 + $0x458] sm:$0xff]
        %v474 = vld [vmem:[%s270 + $0x460] sm:$0xff]
        %v475 = vld [vmem:[%s270 + $0x468] sm:$0xff]
        %v476 = vld [vmem:[%s270 + $0x470] sm:$0xff]
        %v477 = vld [vmem:[%s270 + $0x478] sm:$0xff]
        %v478 = vld [vmem:[%s270 + $0x480] sm:$0xff]
        %v479 = vld [vmem:[%s270 + $0x488] sm:$0xff]
        %v480 = vld [vmem:[%s270 + $0x490] sm:$0xff]
        %v481 = vld [vmem:[%s270 + $0x498] sm:$0xff]
        %v482 = vld [vmem:[%s270 + $0x4a0] sm:$0xff]
        %v483 = vld [vmem:[%s270 + $0x4a8] sm:$0xff]
        %v484 = vld [vmem:[%s270 + $0x4b0] sm:$0xff]
        %v485 = vld [vmem:[%s270 + $0x4b8] sm:$0xff]
        %v486 = vld [vmem:[%s270 + $0x4c0] sm:$0xff]
        %v487 = vld [vmem:[%s270 + $0x4c8] sm:$0xff]
        %v488 = vld [vmem:[%s270 + $0x4d0] sm:$0xff]
        %v489 = vld [vmem:[%s270 + $0x4d8] sm:$0xff]
        %v490 = vld [vmem:[%s270 + $0x4e0] sm:$0xff]
        %v491 = vld [vmem:[%s270 + $0x4e8] sm:$0xff]
        %v492 = vld [vmem:[%s270 + $0x4f0] sm:$0xff]
        %v493 = vld [vmem:[%s270 + $0x4f8] sm:$0xff]
        %v654 = vunpack.c.l.b16 %v334
        %v655 = vunpack.c.h.b16 %v334
        %v656 = vunpack.c.l.b16 %v335
        %v657 = vunpack.c.h.b16 %v335
        %v658 = vunpack.c.l.b16 %v336
        %v659 = vunpack.c.h.b16 %v336
        %v660 = vunpack.c.l.b16 %v337
        %v661 = vunpack.c.h.b16 %v337
        %v662 = vunpack.c.l.b16 %v338
        %v663 = vunpack.c.h.b16 %v338
        %v664 = vunpack.c.l.b16 %v339
        %v665 = vunpack.c.h.b16 %v339
        %v666 = vunpack.c.l.b16 %v340
        %v667 = vunpack.c.h.b16 %v340
        %v668 = vunpack.c.l.b16 %v341
        %v669 = vunpack.c.h.b16 %v341
        %v670 = vunpack.c.l.b16 %v342
        %v671 = vunpack.c.h.b16 %v342
        %v672 = vunpack.c.l.b16 %v343
        %v673 = vunpack.c.h.b16 %v343
        %v674 = vunpack.c.l.b16 %v344
        %v675 = vunpack.c.h.b16 %v344
        %v676 = vunpack.c.l.b16 %v345
        %v677 = vunpack.c.h.b16 %v345
        %v678 = vunpack.c.l.b16 %v346
        %v679 = vunpack.c.h.b16 %v346
        %v680 = vunpack.c.l.b16 %v347
        %v681 = vunpack.c.h.b16 %v347
        %v682 = vunpack.c.l.b16 %v348
        %v683 = vunpack.c.h.b16 %v348
        %v684 = vunpack.c.l.b16 %v349
        %v685 = vunpack.c.h.b16 %v349
        %v686 = vunpack.c.l.b16 %v350
        %v687 = vunpack.c.h.b16 %v350
        %v688 = vunpack.c.l.b16 %v351
        %v689 = vunpack.c.h.b16 %v351
        %v690 = vunpack.c.l.b16 %v352
        %v691 = vunpack.c.h.b16 %v352
        %v692 = vunpack.c.l.b16 %v353
        %v693 = vunpack.c.h.b16 %v353
        %v694 = vunpack.c.l.b16 %v354
        %v695 = vunpack.c.h.b16 %v354
        %v696 = vunpack.c.l.b16 %v355
        %v697 = vunpack.c.h.b16 %v355
        %v698 = vunpack.c.l.b16 %v356
        %v699 = vunpack.c.h.b16 %v356
        %v700 = vunpack.c.l.b16 %v357
        %v701 = vunpack.c.h.b16 %v357
        %v702 = vunpack.c.l.b16 %v358
        %v703 = vunpack.c.h.b16 %v358
        %v704 = vunpack.c.l.b16 %v359
        %v705 = vunpack.c.h.b16 %v359
        %v706 = vunpack.c.l.b16 %v360
        %v707 = vunpack.c.h.b16 %v360
        %v708 = vunpack.c.l.b16 %v361
        %v709 = vunpack.c.h.b16 %v361
        %v710 = vunpack.c.l.b16 %v362
        %v711 = vunpack.c.h.b16 %v362
        %v712 = vunpack.c.l.b16 %v363
        %v713 = vunpack.c.h.b16 %v363
        %v714 = vunpack.c.l.b16 %v364
        %v715 = vunpack.c.h.b16 %v364
        %v716 = vunpack.c.l.b16 %v365
        %v717 = vunpack.c.h.b16 %v365
        %v718 = vunpack.c.l.b16 %v366
        %v719 = vunpack.c.h.b16 %v366
        %v720 = vunpack.c.l.b16 %v367
        %v721 = vunpack.c.h.b16 %v367
        %v722 = vunpack.c.l.b16 %v368
        %v723 = vunpack.c.h.b16 %v368
        %v724 = vunpack.c.l.b16 %v369
        %v725 = vunpack.c.h.b16 %v369
        %v726 = vunpack.c.l.b16 %v370
        %v727 = vunpack.c.h.b16 %v370
        %v728 = vunpack.c.l.b16 %v371
        %v729 = vunpack.c.h.b16 %v371
        %v730 = vunpack.c.l.b16 %v372
        %v731 = vunpack.c.h.b16 %v372
        %v732 = vunpack.c.l.b16 %v373
        %v733 = vunpack.c.h.b16 %v373
        %v734 = vunpack.c.l.b16 %v374
        %v735 = vunpack.c.h.b16 %v374
        %v736 = vunpack.c.l.b16 %v375
        %v737 = vunpack.c.h.b16 %v375
        %v738 = vunpack.c.l.b16 %v376
        %v739 = vunpack.c.h.b16 %v376
        %v740 = vunpack.c.l.b16 %v377
        %v741 = vunpack.c.h.b16 %v377
        %v742 = vunpack.c.l.b16 %v378
        %v743 = vunpack.c.h.b16 %v378
        %v744 = vunpack.c.l.b16 %v379
        %v745 = vunpack.c.h.b16 %v379
        %v746 = vunpack.c.l.b16 %v380
        %v747 = vunpack.c.h.b16 %v380
        %v748 = vunpack.c.l.b16 %v381
        %v749 = vunpack.c.h.b16 %v381
        %v750 = vunpack.c.l.b16 %v382
        %v751 = vunpack.c.h.b16 %v382
        %v752 = vunpack.c.l.b16 %v383
        %v753 = vunpack.c.h.b16 %v383
        %v754 = vunpack.c.l.b16 %v384
        %v755 = vunpack.c.h.b16 %v384
        %v756 = vunpack.c.l.b16 %v385
        %v757 = vunpack.c.h.b16 %v385
        %v758 = vunpack.c.l.b16 %v386
        %v759 = vunpack.c.h.b16 %v386
        %v760 = vunpack.c.l.b16 %v387
        %v761 = vunpack.c.h.b16 %v387
        %v762 = vunpack.c.l.b16 %v388
        %v763 = vunpack.c.h.b16 %v388
        %v764 = vunpack.c.l.b16 %v389
        %v765 = vunpack.c.h.b16 %v389
        %v766 = vunpack.c.l.b16 %v390
        %v767 = vunpack.c.h.b16 %v390
        %v768 = vunpack.c.l.b16 %v391
        %v769 = vunpack.c.h.b16 %v391
        %v770 = vunpack.c.l.b16 %v392
        %v771 = vunpack.c.h.b16 %v392
        %v772 = vunpack.c.l.b16 %v393
        %v773 = vunpack.c.h.b16 %v393
        %v774 = vunpack.c.l.b16 %v394
        %v775 = vunpack.c.h.b16 %v394
        %v776 = vunpack.c.l.b16 %v395
        %v777 = vunpack.c.h.b16 %v395
        %v778 = vunpack.c.l.b16 %v396
        %v779 = vunpack.c.h.b16 %v396
        %v780 = vunpack.c.l.b16 %v397
        %v781 = vunpack.c.h.b16 %v397
        %v782 = vunpack.c.l.b16 %v398
        %v783 = vunpack.c.h.b16 %v398
        %v784 = vunpack.c.l.b16 %v399
        %v785 = vunpack.c.h.b16 %v399
        %v786 = vunpack.c.l.b16 %v400
        %v787 = vunpack.c.h.b16 %v400
        %v788 = vunpack.c.l.b16 %v401
        %v789 = vunpack.c.h.b16 %v401
        %v790 = vunpack.c.l.b16 %v402
        %v791 = vunpack.c.h.b16 %v402
        %v792 = vunpack.c.l.b16 %v403
        %v793 = vunpack.c.h.b16 %v403
        %v794 = vunpack.c.l.b16 %v404
        %v795 = vunpack.c.h.b16 %v404
        %v796 = vunpack.c.l.b16 %v405
        %v797 = vunpack.c.h.b16 %v405
        %v798 = vunpack.c.l.b16 %v406
        %v799 = vunpack.c.h.b16 %v406
        %v800 = vunpack.c.l.b16 %v407
        %v801 = vunpack.c.h.b16 %v407
        %v802 = vunpack.c.l.b16 %v408
        %v803 = vunpack.c.h.b16 %v408
        %v804 = vunpack.c.l.b16 %v409
        %v805 = vunpack.c.h.b16 %v409
        %v806 = vunpack.c.l.b16 %v410
        %v807 = vunpack.c.h.b16 %v410
        %v808 = vunpack.c.l.b16 %v411
        %v809 = vunpack.c.h.b16 %v411
        %v810 = vunpack.c.l.b16 %v412
        %v811 = vunpack.c.h.b16 %v412
        %v812 = vunpack.c.l.b16 %v413
        %v813 = vunpack.c.h.b16 %v413
        %v814 = vunpack.c.l.b16 %v414
        %v815 = vunpack.c.h.b16 %v414
        %v816 = vunpack.c.l.b16 %v415
        %v817 = vunpack.c.h.b16 %v415
        %v818 = vunpack.c.l.b16 %v416
        %v819 = vunpack.c.h.b16 %v416
        %v820 = vunpack.c.l.b16 %v417
        %v821 = vunpack.c.h.b16 %v417
        %v822 = vunpack.c.l.b16 %v418
        %v823 = vunpack.c.h.b16 %v418
        %v824 = vunpack.c.l.b16 %v419
        %v825 = vunpack.c.h.b16 %v419
        %v826 = vunpack.c.l.b16 %v420
        %v827 = vunpack.c.h.b16 %v420
        %v828 = vunpack.c.l.b16 %v421
        %v829 = vunpack.c.h.b16 %v421
        %v830 = vunpack.c.l.b16 %v422
        %v831 = vunpack.c.h.b16 %v422
        %v832 = vunpack.c.l.b16 %v423
        %v833 = vunpack.c.h.b16 %v423
        %v834 = vunpack.c.l.b16 %v424
        %v835 = vunpack.c.h.b16 %v424
        %v836 = vunpack.c.l.b16 %v425
        %v837 = vunpack.c.h.b16 %v425
        %v838 = vunpack.c.l.b16 %v426
        %v839 = vunpack.c.h.b16 %v426
        %v840 = vunpack.c.l.b16 %v427
        %v841 = vunpack.c.h.b16 %v427
        %v842 = vunpack.c.l.b16 %v428
        %v843 = vunpack.c.h.b16 %v428
        %v844 = vunpack.c.l.b16 %v429
        %v845 = vunpack.c.h.b16 %v429
        %v846 = vunpack.c.l.b16 %v430
        %v847 = vunpack.c.h.b16 %v430
        %v848 = vunpack.c.l.b16 %v431
        %v849 = vunpack.c.h.b16 %v431
        %v850 = vunpack.c.l.b16 %v432
        %v851 = vunpack.c.h.b16 %v432
        %v852 = vunpack.c.l.b16 %v433
        %v853 = vunpack.c.h.b16 %v433
        %v854 = vunpack.c.l.b16 %v434
        %v855 = vunpack.c.h.b16 %v434
        %v856 = vunpack.c.l.b16 %v435
        %v857 = vunpack.c.h.b16 %v435
        %v858 = vunpack.c.l.b16 %v436
        %v859 = vunpack.c.h.b16 %v436
        %v860 = vunpack.c.l.b16 %v437
        %v861 = vunpack.c.h.b16 %v437
        %v862 = vunpack.c.l.b16 %v438
        %v863 = vunpack.c.h.b16 %v438
        %v864 = vunpack.c.l.b16 %v439
        %v865 = vunpack.c.h.b16 %v439
        %v866 = vunpack.c.l.b16 %v440
        %v867 = vunpack.c.h.b16 %v440
        %v868 = vunpack.c.l.b16 %v441
        %v869 = vunpack.c.h.b16 %v441
        %v870 = vunpack.c.l.b16 %v442
        %v871 = vunpack.c.h.b16 %v442
        %v872 = vunpack.c.l.b16 %v443
        %v873 = vunpack.c.h.b16 %v443
        %v874 = vunpack.c.l.b16 %v444
        %v875 = vunpack.c.h.b16 %v444
        %v876 = vunpack.c.l.b16 %v445
        %v877 = vunpack.c.h.b16 %v445
        %v878 = vunpack.c.l.b16 %v446
        %v879 = vunpack.c.h.b16 %v446
        %v880 = vunpack.c.l.b16 %v447
        %v881 = vunpack.c.h.b16 %v447
        %v882 = vunpack.c.l.b16 %v448
        %v883 = vunpack.c.h.b16 %v448
        %v884 = vunpack.c.l.b16 %v449
        %v885 = vunpack.c.h.b16 %v449
        %v886 = vunpack.c.l.b16 %v450
        %v887 = vunpack.c.h.b16 %v450
        %v888 = vunpack.c.l.b16 %v451
        %v889 = vunpack.c.h.b16 %v451
        %v890 = vunpack.c.l.b16 %v452
        %v891 = vunpack.c.h.b16 %v452
        %v892 = vunpack.c.l.b16 %v453
        %v893 = vunpack.c.h.b16 %v453
        %v894 = vunpack.c.l.b16 %v454
        %v895 = vunpack.c.h.b16 %v454
        %v896 = vunpack.c.l.b16 %v455
        %v897 = vunpack.c.h.b16 %v455
        %v898 = vunpack.c.l.b16 %v456
        %v899 = vunpack.c.h.b16 %v456
        %v900 = vunpack.c.l.b16 %v457
        %v901 = vunpack.c.h.b16 %v457
        %v902 = vunpack.c.l.b16 %v458
        %v903 = vunpack.c.h.b16 %v458
        %v904 = vunpack.c.l.b16 %v459
        %v905 = vunpack.c.h.b16 %v459
        %v906 = vunpack.c.l.b16 %v460
        %v907 = vunpack.c.h.b16 %v460
        %v908 = vunpack.c.l.b16 %v461
        %v909 = vunpack.c.h.b16 %v461
        %v910 = vunpack.c.l.b16 %v462
        %v911 = vunpack.c.h.b16 %v462
        %v912 = vunpack.c.l.b16 %v463
        %v913 = vunpack.c.h.b16 %v463
        %v914 = vunpack.c.l.b16 %v464
        %v915 = vunpack.c.h.b16 %v464
        %v916 = vunpack.c.l.b16 %v465
        %v917 = vunpack.c.h.b16 %v465
        %v918 = vunpack.c.l.b16 %v466
        %v919 = vunpack.c.h.b16 %v466
        %v920 = vunpack.c.l.b16 %v467
        %v921 = vunpack.c.h.b16 %v467
        %v922 = vunpack.c.l.b16 %v468
        %v923 = vunpack.c.h.b16 %v468
        %v924 = vunpack.c.l.b16 %v469
        %v925 = vunpack.c.h.b16 %v469
        %v926 = vunpack.c.l.b16 %v470
        %v927 = vunpack.c.h.b16 %v470
        %v928 = vunpack.c.l.b16 %v471
        %v929 = vunpack.c.h.b16 %v471
        %v930 = vunpack.c.l.b16 %v472
        %v931 = vunpack.c.h.b16 %v472
        %v932 = vunpack.c.l.b16 %v473
        %v933 = vunpack.c.h.b16 %v473
        %v934 = vunpack.c.l.b16 %v474
        %v935 = vunpack.c.h.b16 %v474
        %v936 = vunpack.c.l.b16 %v475
        %v937 = vunpack.c.h.b16 %v475
        %v938 = vunpack.c.l.b16 %v476
        %v939 = vunpack.c.h.b16 %v476
        %v940 = vunpack.c.l.b16 %v477
        %v941 = vunpack.c.h.b16 %v477
        %v942 = vunpack.c.l.b16 %v478
        %v943 = vunpack.c.h.b16 %v478
        %v944 = vunpack.c.l.b16 %v479
        %v945 = vunpack.c.h.b16 %v479
        %v946 = vunpack.c.l.b16 %v480
        %v947 = vunpack.c.h.b16 %v480
        %v948 = vunpack.c.l.b16 %v481
        %v949 = vunpack.c.h.b16 %v481
        %v950 = vunpack.c.l.b16 %v482
        %v951 = vunpack.c.h.b16 %v482
        %v952 = vunpack.c.l.b16 %v483
        %v953 = vunpack.c.h.b16 %v483
        %v954 = vunpack.c.l.b16 %v484
        %v955 = vunpack.c.h.b16 %v484
        %v956 = vunpack.c.l.b16 %v485
        %v957 = vunpack.c.h.b16 %v485
        %v958 = vunpack.c.l.b16 %v486
        %v959 = vunpack.c.h.b16 %v486
        %v960 = vunpack.c.l.b16 %v487
        %v961 = vunpack.c.h.b16 %v487
        %v962 = vunpack.c.l.b16 %v488
        %v963 = vunpack.c.h.b16 %v488
        %v964 = vunpack.c.l.b16 %v489
        %v965 = vunpack.c.h.b16 %v489
        %v966 = vunpack.c.l.b16 %v490
        %v967 = vunpack.c.h.b16 %v490
        %v968 = vunpack.c.l.b16 %v491
        %v969 = vunpack.c.h.b16 %v491
        %v970 = vunpack.c.l.b16 %v492
        %v971 = vunpack.c.h.b16 %v492
        %v972 = vunpack.c.l.b16 %v493
        %v973 = vunpack.c.h.b16 %v493
        %v974 = vpack.c.b16 %v658, %v654
        %v975 = vpack.c.b16 %v659, %v655
        %v976 = vpack.c.b16 %v660, %v656
        %v977 = vpack.c.b16 %v661, %v657
        %v978 = vpack.c.b16 %v666, %v662
        %v979 = vpack.c.b16 %v667, %v663
        %v980 = vpack.c.b16 %v668, %v664
        %v981 = vpack.c.b16 %v669, %v665
        %v982 = vpack.c.b16 %v674, %v670
        %v983 = vpack.c.b16 %v675, %v671
        %v984 = vpack.c.b16 %v676, %v672
        %v985 = vpack.c.b16 %v677, %v673
        %v986 = vpack.c.b16 %v682, %v678
        %v987 = vpack.c.b16 %v683, %v679
        %v988 = vpack.c.b16 %v684, %v680
        %v989 = vpack.c.b16 %v685, %v681
        %v990 = vpack.c.b16 %v690, %v686
        %v991 = vpack.c.b16 %v691, %v687
        %v992 = vpack.c.b16 %v692, %v688
        %v993 = vpack.c.b16 %v693, %v689
        %v994 = vpack.c.b16 %v698, %v694
        %v995 = vpack.c.b16 %v699, %v695
        %v996 = vpack.c.b16 %v700, %v696
        %v997 = vpack.c.b16 %v701, %v697
        %v998 = vpack.c.b16 %v706, %v702
        %v999 = vpack.c.b16 %v707, %v703
        %v1000 = vpack.c.b16 %v708, %v704
        %v1001 = vpack.c.b16 %v709, %v705
        %v1002 = vpack.c.b16 %v714, %v710
        %v1003 = vpack.c.b16 %v715, %v711
        %v1004 = vpack.c.b16 %v716, %v712
        %v1005 = vpack.c.b16 %v717, %v713
        %v1006 = vpack.c.b16 %v722, %v718
        %v1007 = vpack.c.b16 %v723, %v719
        %v1008 = vpack.c.b16 %v724, %v720
        %v1009 = vpack.c.b16 %v725, %v721
        %v1010 = vpack.c.b16 %v730, %v726
        %v1011 = vpack.c.b16 %v731, %v727
        %v1012 = vpack.c.b16 %v732, %v728
        %v1013 = vpack.c.b16 %v733, %v729
        %v1014 = vpack.c.b16 %v738, %v734
        %v1015 = vpack.c.b16 %v739, %v735
        %v1016 = vpack.c.b16 %v740, %v736
        %v1017 = vpack.c.b16 %v741, %v737
        %v1018 = vpack.c.b16 %v746, %v742
        %v1019 = vpack.c.b16 %v747, %v743
        %v1020 = vpack.c.b16 %v748, %v744
        %v1021 = vpack.c.b16 %v749, %v745
        %v1022 = vpack.c.b16 %v754, %v750
        %v1023 = vpack.c.b16 %v755, %v751
        %v1024 = vpack.c.b16 %v756, %v752
        %v1025 = vpack.c.b16 %v757, %v753
        %v1026 = vpack.c.b16 %v762, %v758
        %v1027 = vpack.c.b16 %v763, %v759
        %v1028 = vpack.c.b16 %v764, %v760
        %v1029 = vpack.c.b16 %v765, %v761
        %v1030 = vpack.c.b16 %v770, %v766
        %v1031 = vpack.c.b16 %v771, %v767
        %v1032 = vpack.c.b16 %v772, %v768
        %v1033 = vpack.c.b16 %v773, %v769
        %v1034 = vpack.c.b16 %v778, %v774
        %v1035 = vpack.c.b16 %v779, %v775
        %v1036 = vpack.c.b16 %v780, %v776
        %v1037 = vpack.c.b16 %v781, %v777
        %v1038 = vpack.c.b16 %v786, %v782
        %v1039 = vpack.c.b16 %v787, %v783
        %v1040 = vpack.c.b16 %v788, %v784
        %v1041 = vpack.c.b16 %v789, %v785
        %v1042 = vpack.c.b16 %v794, %v790
        %v1043 = vpack.c.b16 %v795, %v791
        %v1044 = vpack.c.b16 %v796, %v792
        %v1045 = vpack.c.b16 %v797, %v793
        %v1046 = vpack.c.b16 %v802, %v798
        %v1047 = vpack.c.b16 %v803, %v799
        %v1048 = vpack.c.b16 %v804, %v800
        %v1049 = vpack.c.b16 %v805, %v801
        %v1050 = vpack.c.b16 %v810, %v806
        %v1051 = vpack.c.b16 %v811, %v807
        %v1052 = vpack.c.b16 %v812, %v808
        %v1053 = vpack.c.b16 %v813, %v809
        %v1054 = vpack.c.b16 %v818, %v814
        %v1055 = vpack.c.b16 %v819, %v815
        %v1056 = vpack.c.b16 %v820, %v816
        %v1057 = vpack.c.b16 %v821, %v817
        %v1058 = vpack.c.b16 %v826, %v822
        %v1059 = vpack.c.b16 %v827, %v823
        %v1060 = vpack.c.b16 %v828, %v824
        %v1061 = vpack.c.b16 %v829, %v825
        %v1062 = vpack.c.b16 %v834, %v830
        %v1063 = vpack.c.b16 %v835, %v831
        %v1064 = vpack.c.b16 %v836, %v832
        %v1065 = vpack.c.b16 %v837, %v833
        %v1066 = vpack.c.b16 %v842, %v838
        %v1067 = vpack.c.b16 %v843, %v839
        %v1068 = vpack.c.b16 %v844, %v840
        %v1069 = vpack.c.b16 %v845, %v841
        %v1070 = vpack.c.b16 %v850, %v846
        %v1071 = vpack.c.b16 %v851, %v847
        %v1072 = vpack.c.b16 %v852, %v848
        %v1073 = vpack.c.b16 %v853, %v849
        %v1074 = vpack.c.b16 %v858, %v854
        %v1075 = vpack.c.b16 %v859, %v855
        %v1076 = vpack.c.b16 %v860, %v856
        %v1077 = vpack.c.b16 %v861, %v857
        %v1078 = vpack.c.b16 %v866, %v862
        %v1079 = vpack.c.b16 %v867, %v863
        %v1080 = vpack.c.b16 %v868, %v864
        %v1081 = vpack.c.b16 %v869, %v865
        %v1082 = vpack.c.b16 %v874, %v870
        %v1083 = vpack.c.b16 %v875, %v871
        %v1084 = vpack.c.b16 %v876, %v872
        %v1085 = vpack.c.b16 %v877, %v873
        %v1086 = vpack.c.b16 %v882, %v878
        %v1087 = vpack.c.b16 %v883, %v879
        %v1088 = vpack.c.b16 %v884, %v880
        %v1089 = vpack.c.b16 %v885, %v881
        %v1090 = vpack.c.b16 %v890, %v886
        %v1091 = vpack.c.b16 %v891, %v887
        %v1092 = vpack.c.b16 %v892, %v888
        %v1093 = vpack.c.b16 %v893, %v889
        %v1094 = vpack.c.b16 %v898, %v894
        %v1095 = vpack.c.b16 %v899, %v895
        %v1096 = vpack.c.b16 %v900, %v896
        %v1097 = vpack.c.b16 %v901, %v897
        %v1098 = vpack.c.b16 %v906, %v902
        %v1099 = vpack.c.b16 %v907, %v903
        %v1100 = vpack.c.b16 %v908, %v904
        %v1101 = vpack.c.b16 %v909, %v905
        %v1102 = vpack.c.b16 %v914, %v910
        %v1103 = vpack.c.b16 %v915, %v911
        %v1104 = vpack.c.b16 %v916, %v912
        %v1105 = vpack.c.b16 %v917, %v913
        %v1106 = vpack.c.b16 %v922, %v918
        %v1107 = vpack.c.b16 %v923, %v919
        %v1108 = vpack.c.b16 %v924, %v920
        %v1109 = vpack.c.b16 %v925, %v921
        %v1110 = vpack.c.b16 %v930, %v926
        %v1111 = vpack.c.b16 %v931, %v927
        %v1112 = vpack.c.b16 %v932, %v928
        %v1113 = vpack.c.b16 %v933, %v929
        %v1114 = vpack.c.b16 %v938, %v934
        %v1115 = vpack.c.b16 %v939, %v935
        %v1116 = vpack.c.b16 %v940, %v936
        %v1117 = vpack.c.b16 %v941, %v937
        %v1118 = vpack.c.b16 %v946, %v942
        %v1119 = vpack.c.b16 %v947, %v943
        %v1120 = vpack.c.b16 %v948, %v944
        %v1121 = vpack.c.b16 %v949, %v945
        %v1122 = vpack.c.b16 %v954, %v950
        %v1123 = vpack.c.b16 %v955, %v951
        %v1124 = vpack.c.b16 %v956, %v952
        %v1125 = vpack.c.b16 %v957, %v953
        %v1126 = vpack.c.b16 %v962, %v958
        %v1127 = vpack.c.b16 %v963, %v959
        %v1128 = vpack.c.b16 %v964, %v960
        %v1129 = vpack.c.b16 %v965, %v961
        %v1130 = vpack.c.b16 %v970, %v966
        %v1131 = vpack.c.b16 %v971, %v967
        %v1132 = vpack.c.b16 %v972, %v968
        %v1133 = vpack.c.b16 %v973, %v969
        %1294 = vmatprep.subr.bf16.mxu0 %v1003
        %1295 = vmatpush1.bf16.msra.mxu0 %v1002
        %1296 = vmatprep.subr.bf16.mxu0 %v999
        %1297 = vmatpush1.bf16.msra.mxu0 %v998
        %1298 = vmatprep.subr.bf16.mxu0 %v995
        %1299 = vmatpush1.bf16.msra.mxu0 %v994
        %1300 = vmatprep.subr.bf16.mxu0 %v991
        %1301 = vmatpush1.bf16.msra.mxu0 %v990
        %1302 = vmatprep.subr.bf16.mxu0 %v987
        %1303 = vmatpush1.bf16.msra.mxu0 %v986
        %1304 = vmatprep.subr.bf16.mxu0 %v983
        %1305 = vmatpush1.bf16.msra.mxu0 %v982
        %1306 = vmatprep.subr.bf16.mxu0 %v979
        %1307 = vmatpush1.bf16.msra.mxu0 %v978
        %1308 = vmatprep.subr.bf16.mxu0 %v975
        %1309 = vmatpush1.bf16.msra.mxu0 %v974
        %1310 = vmatprep.subr.bf16.mxu0 %v1035
        %1311 = vmatpush2.bf16.msra.mxu0 %v1034
        %1312 = vmatprep.subr.bf16.mxu0 %v1031
        %1313 = vmatpush2.bf16.msra.mxu0 %v1030
        %1314 = vmatprep.subr.bf16.mxu0 %v1027
        %1315 = vmatpush2.bf16.msra.mxu0 %v1026
        %1316 = vmatprep.subr.bf16.mxu0 %v1023
        %1317 = vmatpush2.bf16.msra.mxu0 %v1022
        %1318 = vmatprep.subr.bf16.mxu0 %v1019
        %1319 = vmatpush2.bf16.msra.mxu0 %v1018
        %1320 = vmatprep.subr.bf16.mxu0 %v1015
        %1321 = vmatpush2.bf16.msra.mxu0 %v1014
        %1322 = vmatprep.subr.bf16.mxu0 %v1011
        %1323 = vmatpush2.bf16.msra.mxu0 %v1010
        %1324 = vmatprep.subr.bf16.mxu0 %v1007
        %1325 = vmatpush2.bf16.msra.mxu0 %v1006
        %1326 = vmatprep.mubr.bf16.mxu0 %v330
        %1327 = vmatmul.mubr.bf16.gmra.mxu0 %v329
        %v1328 = vpop.f32.mrf.mxu0
        %v1329 = vadd.f32 0.0, %v1328
        %v1330 = vpop.f32.mrf.mxu0
        %v1331 = vadd.f32 0.0, %v1330
        %v1332 = vpop.f32.mrf.mxu0
        %v1333 = vpop.f32.mrf.mxu0
        %1334 = vdwg.mxu0
        %1335 = vmatprep.subr.bf16.mxu0 %v1067
        %1336 = vmatpush1.bf16.msra.mxu0 %v1066
        %1337 = vmatprep.subr.bf16.mxu0 %v1063
        %1338 = vmatpush1.bf16.msra.mxu0 %v1062
        %1339 = vmatprep.subr.bf16.mxu0 %v1059
        %1340 = vmatpush1.bf16.msra.mxu0 %v1058
        %1341 = vmatprep.subr.bf16.mxu0 %v1055
        %1342 = vmatpush1.bf16.msra.mxu0 %v1054
        %1343 = vmatprep.subr.bf16.mxu0 %v1051
        %1344 = vmatpush1.bf16.msra.mxu0 %v1050
        %1345 = vmatprep.subr.bf16.mxu0 %v1047
        %1346 = vmatpush1.bf16.msra.mxu0 %v1046
        %1347 = vmatprep.subr.bf16.mxu0 %v1043
        %1348 = vmatpush1.bf16.msra.mxu0 %v1042
        %1349 = vmatprep.subr.bf16.mxu0 %v1039
        %1350 = vmatpush1.bf16.msra.mxu0 %v1038
        %1351 = vmatprep.subr.bf16.mxu0 %v1099
        %1352 = vmatpush2.bf16.msra.mxu0 %v1098
        %1353 = vmatprep.subr.bf16.mxu0 %v1095
        %1354 = vmatpush2.bf16.msra.mxu0 %v1094
        %1355 = vmatprep.subr.bf16.mxu0 %v1091
        %1356 = vmatpush2.bf16.msra.mxu0 %v1090
        %1357 = vmatprep.subr.bf16.mxu0 %v1087
        %1358 = vmatpush2.bf16.msra.mxu0 %v1086
        %1359 = vmatprep.subr.bf16.mxu0 %v1083
        %1360 = vmatpush2.bf16.msra.mxu0 %v1082
        %1361 = vmatprep.subr.bf16.mxu0 %v1079
        %1362 = vmatpush2.bf16.msra.mxu0 %v1078
        %1363 = vmatprep.subr.bf16.mxu0 %v1075
        %1364 = vmatpush2.bf16.msra.mxu0 %v1074
        %1365 = vmatprep.subr.bf16.mxu0 %v1071
        %1366 = vmatpush2.bf16.msra.mxu0 %v1070
        %1367 = vmatprep.mubr.bf16.mxu0 %v332
        %1368 = vmatmul.mubr.bf16.gmra.mxu0 %v331
        %v1369 = vpop.f32.mrf.mxu0
        %v1370 = vadd.f32 %v1329, %v1369
        %v1371 = vpop.f32.mrf.mxu0
        %v1372 = vadd.f32 %v1331, %v1371
        %v1373 = vpop.f32.mrf.mxu0
        %v1374 = vpop.f32.mrf.mxu0
        %1375 = vdwg.mxu0
        %1376 = vmatprep.subr.bf16.mxu0 %v1131
        %1377 = vmatpush1.bf16.msra.mxu0 %v1130
        %1378 = vmatprep.subr.bf16.mxu0 %v1127
        %1379 = vmatpush1.bf16.msra.mxu0 %v1126
        %1380 = vmatprep.subr.bf16.mxu0 %v1123
        %1381 = vmatpush1.bf16.msra.mxu0 %v1122
        %1382 = vmatprep.subr.bf16.mxu0 %v1119
        %1383 = vmatpush1.bf16.msra.mxu0 %v1118
        %1384 = vmatprep.subr.bf16.mxu0 %v1115
        %1385 = vmatpush1.bf16.msra.mxu0 %v1114
        %1386 = vmatprep.subr.bf16.mxu0 %v1111
        %1387 = vmatpush1.bf16.msra.mxu0 %v1110
        %1388 = vmatprep.subr.bf16.mxu0 %v1107
        %1389 = vmatpush1.bf16.msra.mxu0 %v1106
        %1390 = vmatprep.subr.bf16.mxu0 %v1103
        %1391 = vmatpush1.bf16.msra.mxu0 %v1102
        %1392 = vmatprep.subr.bf16.mxu0 0
        %1393 = vmatpush2.bf16.msra.mxu0 0
        %1394 = vmatprep.subr.bf16.mxu0 0
        %1395 = vmatpush2.bf16.msra.mxu0 0
        %1396 = vmatprep.subr.bf16.mxu0 0
        %1397 = vmatpush2.bf16.msra.mxu0 0
        %1398 = vmatprep.subr.bf16.mxu0 0
        %1399 = vmatpush2.bf16.msra.mxu0 0
        %1400 = vmatprep.subr.bf16.mxu0 0
        %1401 = vmatpush2.bf16.msra.mxu0 0
        %1402 = vmatprep.subr.bf16.mxu0 0
        %1403 = vmatpush2.bf16.msra.mxu0 0
        %1404 = vmatprep.subr.bf16.mxu0 0
        %1405 = vmatpush2.bf16.msra.mxu0 0
        %1406 = vmatprep.subr.bf16.mxu0 0
        %1407 = vmatpush2.bf16.msra.mxu0 0
        %1408 = vmatprep.mubr.bf16.mxu0 0
        %1409 = vmatmul.mubr.bf16.gmra.mxu0 %v333
        %v1410 = vpop.f32.mrf.mxu0
        %v1411 = vadd.f32 %v1370, %v1410
        %v1412 = vpop.f32.mrf.mxu0
        %v1413 = vadd.f32 %v1372, %v1412
        %v1414 = vpop.f32.mrf.mxu0
        %v1415 = vpop.f32.mrf.mxu0
        %1416 = vdwg.mxu0
        %1417 = vmatprep.subr.bf16.mxu0 %v1005
        %1418 = vmatpush1.bf16.msra.mxu0 %v1004
        %1419 = vmatprep.subr.bf16.mxu0 %v1001
        %1420 = vmatpush1.bf16.msra.mxu0 %v1000
        %1421 = vmatprep.subr.bf16.mxu0 %v997
        %1422 = vmatpush1.bf16.msra.mxu0 %v996
        %1423 = vmatprep.subr.bf16.mxu0 %v993
        %1424 = vmatpush1.bf16.msra.mxu0 %v992
        %1425 = vmatprep.subr.bf16.mxu0 %v989
        %1426 = vmatpush1.bf16.msra.mxu0 %v988
        %1427 = vmatprep.subr.bf16.mxu0 %v985
        %1428 = vmatpush1.bf16.msra.mxu0 %v984
        %1429 = vmatprep.subr.bf16.mxu0 %v981
        %1430 = vmatpush1.bf16.msra.mxu0 %v980
        %1431 = vmatprep.subr.bf16.mxu0 %v977
        %1432 = vmatpush1.bf16.msra.mxu0 %v976
        %1433 = vmatprep.subr.bf16.mxu0 %v1037
        %1434 = vmatpush2.bf16.msra.mxu0 %v1036
        %1435 = vmatprep.subr.bf16.mxu0 %v1033
        %1436 = vmatpush2.bf16.msra.mxu0 %v1032
        %1437 = vmatprep.subr.bf16.mxu0 %v1029
        %1438 = vmatpush2.bf16.msra.mxu0 %v1028
        %1439 = vmatprep.subr.bf16.mxu0 %v1025
        %1440 = vmatpush2.bf16.msra.mxu0 %v1024
        %1441 = vmatprep.subr.bf16.mxu0 %v1021
        %1442 = vmatpush2.bf16.msra.mxu0 %v1020
        %1443 = vmatprep.subr.bf16.mxu0 %v1017
        %1444 = vmatpush2.bf16.msra.mxu0 %v1016
        %1445 = vmatprep.subr.bf16.mxu0 %v1013
        %1446 = vmatpush2.bf16.msra.mxu0 %v1012
        %1447 = vmatprep.subr.bf16.mxu0 %v1009
        %1448 = vmatpush2.bf16.msra.mxu0 %v1008
        %1449 = vmatprep.mubr.bf16.mxu0 %v330
        %1450 = vmatmul.mubr.bf16.gmra.mxu0 %v329
        %v1451 = vpop.f32.mrf.mxu0
        %v1452 = vadd.f32 0.0, %v1451
        %v1453 = vpop.f32.mrf.mxu0
        %v1454 = vadd.f32 0.0, %v1453
        %v1455 = vpop.f32.mrf.mxu0
        %v1456 = vpop.f32.mrf.mxu0
        %1457 = vdwg.mxu0
        %1458 = vmatprep.subr.bf16.mxu0 %v1069
        %1459 = vmatpush1.bf16.msra.mxu0 %v1068
        %1460 = vmatprep.subr.bf16.mxu0 %v1065
        %1461 = vmatpush1.bf16.msra.mxu0 %v1064
        %1462 = vmatprep.subr.bf16.mxu0 %v1061
        %1463 = vmatpush1.bf16.msra.mxu0 %v1060
        %1464 = vmatprep.subr.bf16.mxu0 %v1057
        %1465 = vmatpush1.bf16.msra.mxu0 %v1056
        %1466 = vmatprep.subr.bf16.mxu0 %v1053
        %1467 = vmatpush1.bf16.msra.mxu0 %v1052
        %1468 = vmatprep.subr.bf16.mxu0 %v1049
        %1469 = vmatpush1.bf16.msra.mxu0 %v1048
        %1470 = vmatprep.subr.bf16.mxu0 %v1045
        %1471 = vmatpush1.bf16.msra.mxu0 %v1044
        %1472 = vmatprep.subr.bf16.mxu0 %v1041
        %1473 = vmatpush1.bf16.msra.mxu0 %v1040
        %1474 = vmatprep.subr.bf16.mxu0 %v1101
        %1475 = vmatpush2.bf16.msra.mxu0 %v1100
        %1476 = vmatprep.subr.bf16.mxu0 %v1097
        %1477 = vmatpush2.bf16.msra.mxu0 %v1096
        %1478 = vmatprep.subr.bf16.mxu0 %v1093
        %1479 = vmatpush2.bf16.msra.mxu0 %v1092
        %1480 = vmatprep.subr.bf16.mxu0 %v1089
        %1481 = vmatpush2.bf16.msra.mxu0 %v1088
        %1482 = vmatprep.subr.bf16.mxu0 %v1085
        %1483 = vmatpush2.bf16.msra.mxu0 %v1084
        %1484 = vmatprep.subr.bf16.mxu0 %v1081
        %1485 = vmatpush2.bf16.msra.mxu0 %v1080
        %1486 = vmatprep.subr.bf16.mxu0 %v1077
        %1487 = vmatpush2.bf16.msra.mxu0 %v1076
        %1488 = vmatprep.subr.bf16.mxu0 %v1073
        %1489 = vmatpush2.bf16.msra.mxu0 %v1072
        %1490 = vmatprep.mubr.bf16.mxu0 %v332
        %1491 = vmatmul.mubr.bf16.gmra.mxu0 %v331
        %v1492 = vpop.f32.mrf.mxu0
        %v1493 = vadd.f32 %v1452, %v1492
        %v1494 = vpop.f32.mrf.mxu0
        %v1495 = vadd.f32 %v1454, %v1494
        %v1496 = vpop.f32.mrf.mxu0
        %v1497 = vpop.f32.mrf.mxu0
        %1498 = vdwg.mxu0
        %1499 = vmatprep.subr.bf16.mxu0 %v1133
        %1500 = vmatpush1.bf16.msra.mxu0 %v1132
        %1501 = vmatprep.subr.bf16.mxu0 %v1129
        %1502 = vmatpush1.bf16.msra.mxu0 %v1128
        %1503 = vmatprep.subr.bf16.mxu0 %v1125
        %1504 = vmatpush1.bf16.msra.mxu0 %v1124
        %1505 = vmatprep.subr.bf16.mxu0 %v1121
        %1506 = vmatpush1.bf16.msra.mxu0 %v1120
        %1507 = vmatprep.subr.bf16.mxu0 %v1117
        %1508 = vmatpush1.bf16.msra.mxu0 %v1116
        %1509 = vmatprep.subr.bf16.mxu0 %v1113
        %1510 = vmatpush1.bf16.msra.mxu0 %v1112
        %1511 = vmatprep.subr.bf16.mxu0 %v1109
        %1512 = vmatpush1.bf16.msra.mxu0 %v1108
        %1513 = vmatprep.subr.bf16.mxu0 %v1105
        %1514 = vmatpush1.bf16.msra.mxu0 %v1104
        %1515 = vmatprep.subr.bf16.mxu0 0
        %1516 = vmatpush2.bf16.msra.mxu0 0
        %1517 = vmatprep.subr.bf16.mxu0 0
        %1518 = vmatpush2.bf16.msra.mxu0 0
        %1519 = vmatprep.subr.bf16.mxu0 0
        %1520 = vmatpush2.bf16.msra.mxu0 0
        %1521 = vmatprep.subr.bf16.mxu0 0
        %1522 = vmatpush2.bf16.msra.mxu0 0
        %1523 = vmatprep.subr.bf16.mxu0 0
        %1524 = vmatpush2.bf16.msra.mxu0 0
        %1525 = vmatprep.subr.bf16.mxu0 0
        %1526 = vmatpush2.bf16.msra.mxu0 0
        %1527 = vmatprep.subr.bf16.mxu0 0
        %1528 = vmatpush2.bf16.msra.mxu0 0
        %1529 = vmatprep.subr.bf16.mxu0 0
        %1530 = vmatpush2.bf16.msra.mxu0 0
        %1531 = vmatprep.mubr.bf16.mxu0 0
        %1532 = vmatmul.mubr.bf16.gmra.mxu0 %v333
        %v1533 = vpop.f32.mrf.mxu0
        %v1534 = vadd.f32 %v1493, %v1533
        %v1535 = vpop.f32.mrf.mxu0
        %v1536 = vadd.f32 %v1495, %v1535
        %v1537 = vpop.f32.mrf.mxu0
        %v1538 = vpop.f32.mrf.mxu0
        %1539 = vdwg.mxu0
        %v1540 = vadd.f32 %v320, %v1411
        %v1541 = vadd.f32 %v321, %v1413
        %v1542 = vadd.f32 %v322, %v1534
        %v1543 = vadd.f32 %v323, %v1536
        %1544 = vst [vmem:[#allocation2] sm:$0xff] %v1540
        %1545 = vst [vmem:[#allocation2 + $0x8] sm:$0xff] %v1541
        %1546 = vst [vmem:[#allocation2 + $0x10] sm:$0xff] %v1542
        %1547 = vst [vmem:[#allocation2 + $0x18] sm:$0xff] %v1543
        %p1548 = scmp.eq.s32.totalorder %s24, 3
        // Predicated region
        $region65: #{tpu_custom_call.1} parent=39 // pred_check
          %p1549 = pneg %p1548
        $region66: #{tpu_custom_call.1} parent=39 // pred_check_branch
          %1551 = sbr.rel (%p1549) target = $region68
        $region67: #{tpu_custom_call.1} parent=39 // pred_region
          %v1552 = vld [vmem:[#allocation2] sm:$0xff]
          %v1553 = vld [vmem:[#allocation2 + $0x8] sm:$0xff]
          %v1554 = vld [vmem:[#allocation2 + $0x10] sm:$0xff]
          %v1555 = vld [vmem:[#allocation2 + $0x18] sm:$0xff]
          %v1556 = vld [vmem:[#allocation8] sm:$0xf]
          %v1558 = vlaneseq
          %v1559 = vshrl.u32 %v1558, 7
          %v1560 = vsub.s32 0, %v1559
          %v1561 = vrot.slane %v1556, %v1560
          %v1562 = vlaneseq
          %v1563 = vshrl.u32 %v1562, 7
          %v1564 = vsub.s32 1, %v1563
          %v1565 = vrot.slane %v1556, %v1564
          %v1566 = vlaneseq
          %v1567 = vshrl.u32 %v1566, 7
          %v1568 = vsub.s32 2, %v1567
          %v1569 = vrot.slane %v1556, %v1568
          %v1570 = vlaneseq
          %v1571 = vshrl.u32 %v1570, 7
          %v1572 = vsub.s32 3, %v1571
          %v1573 = vrot.slane %v1556, %v1572
          %v1578 = vadd.f32 %v1552, %v1561
          %v1579 = vadd.f32 %v1553, %v1565
          %v1580 = vadd.f32 %v1554, %v1569
          %v1581 = vadd.f32 %v1555, %v1573
          %v1582 = vmax.f32 %v1578, 0.0
          %v1583 = vmax.f32 %v1579, 0.0
          %v1584 = vmax.f32 %v1580, 0.0
          %v1585 = vmax.f32 %v1581, 0.0
          %v1586 = vpack.c.bf16 %v1582, %v1582
          %v1587 = vpack.c.bf16 %v1583, %v1583
          %v1588 = vpack.c.bf16 %v1584, %v1584
          %v1589 = vpack.c.bf16 %v1585, %v1585
          %v1590 = vld [vmem:[#allocation9] sm:$0xf]
          %v1591 = vld [vmem:[#allocation9 + $0x4] sm:$0xf]
          %v1592 = vld [vmem:[#allocation9 + $0x8] sm:$0xf]
          %v1593 = vld [vmem:[#allocation9 + $0xc] sm:$0xf]
          %v1594 = vld [vmem:[#allocation9 + $0x10] sm:$0xf]
          %v1595 = vld [vmem:[#allocation9 + $0x14] sm:$0xf]
          %v1596 = vld [vmem:[#allocation9 + $0x18] sm:$0xf]
          %v1597 = vld [vmem:[#allocation9 + $0x1c] sm:$0xf]
          %v1598 = vld [vmem:[#allocation9 + $0x20] sm:$0xf]
          %v1599 = vld [vmem:[#allocation9 + $0x24] sm:$0xf]
          %v1600 = vld [vmem:[#allocation9 + $0x28] sm:$0xf]
          %v1601 = vld [vmem:[#allocation9 + $0x2c] sm:$0xf]
          %v1602 = vld [vmem:[#allocation9 + $0x30] sm:$0xf]
          %v1603 = vld [vmem:[#allocation9 + $0x34] sm:$0xf]
          %v1604 = vld [vmem:[#allocation9 + $0x38] sm:$0xf]
          %v1605 = vld [vmem:[#allocation9 + $0x3c] sm:$0xf]
          %v1606 = vld [vmem:[#allocation9 + $0x40] sm:$0xf]
          %v1607 = vld [vmem:[#allocation9 + $0x44] sm:$0xf]
          %v1608 = vld [vmem:[#allocation9 + $0x48] sm:$0xf]
          %v1609 = vld [vmem:[#allocation9 + $0x4c] sm:$0xf]
          %v1610 = vld [vmem:[#allocation9 + $0x50] sm:$0xf]
          %v1611 = vld [vmem:[#allocation9 + $0x54] sm:$0xf]
          %v1612 = vld [vmem:[#allocation9 + $0x58] sm:$0xf]
          %v1613 = vld [vmem:[#allocation9 + $0x5c] sm:$0xf]
          %v1614 = vld [vmem:[#allocation9 + $0x60] sm:$0xf]
          %v1615 = vld [vmem:[#allocation9 + $0x64] sm:$0xf]
          %v1616 = vld [vmem:[#allocation9 + $0x68] sm:$0xf]
          %v1617 = vld [vmem:[#allocation9 + $0x6c] sm:$0xf]
          %v1618 = vld [vmem:[#allocation9 + $0x70] sm:$0xf]
          %v1619 = vld [vmem:[#allocation9 + $0x74] sm:$0xf]
          %v1620 = vld [vmem:[#allocation9 + $0x78] sm:$0xf]
          %v1621 = vld [vmem:[#allocation9 + $0x7c] sm:$0xf]
          %v1622 = vld [vmem:[#allocation9 + $0x80] sm:$0xf]
          %v1623 = vld [vmem:[#allocation9 + $0x84] sm:$0xf]
          %v1624 = vld [vmem:[#allocation9 + $0x88] sm:$0xf]
          %v1625 = vld [vmem:[#allocation9 + $0x8c] sm:$0xf]
          %v1626 = vld [vmem:[#allocation9 + $0x90] sm:$0xf]
          %v1627 = vld [vmem:[#allocation9 + $0x94] sm:$0xf]
          %v1628 = vld [vmem:[#allocation9 + $0x98] sm:$0xf]
          %v1629 = vld [vmem:[#allocation9 + $0x9c] sm:$0xf]
          %v1630 = vld [vmem:[#allocation9 + $0xa0] sm:$0xf]
          %v1631 = vld [vmem:[#allocation9 + $0xa4] sm:$0xf]
          %v1632 = vld [vmem:[#allocation9 + $0xa8] sm:$0xf]
          %v1633 = vld [vmem:[#allocation9 + $0xac] sm:$0xf]
          %v1634 = vld [vmem:[#allocation9 + $0xb0] sm:$0xf]
          %v1635 = vld [vmem:[#allocation9 + $0xb4] sm:$0xf]
          %v1636 = vld [vmem:[#allocation9 + $0xb8] sm:$0xf]
          %v1637 = vld [vmem:[#allocation9 + $0xbc] sm:$0xf]
          %v1638 = vld [vmem:[#allocation9 + $0xc0] sm:$0xf]
          %v1639 = vld [vmem:[#allocation9 + $0xc4] sm:$0xf]
          %v1640 = vld [vmem:[#allocation9 + $0xc8] sm:$0xf]
          %v1641 = vld [vmem:[#allocation9 + $0xcc] sm:$0xf]
          %v1642 = vld [vmem:[#allocation9 + $0xd0] sm:$0xf]
          %v1643 = vld [vmem:[#allocation9 + $0xd4] sm:$0xf]
          %v1644 = vld [vmem:[#allocation9 + $0xd8] sm:$0xf]
          %v1645 = vld [vmem:[#allocation9 + $0xdc] sm:$0xf]
          %v1646 = vld [vmem:[#allocation9 + $0xe0] sm:$0xf]
          %v1647 = vld [vmem:[#allocation9 + $0xe4] sm:$0xf]
          %v1648 = vld [vmem:[#allocation9 + $0xe8] sm:$0xf]
          %v1649 = vld [vmem:[#allocation9 + $0xec] sm:$0xf]
          %v1650 = vld [vmem:[#allocation9 + $0xf0] sm:$0xf]
          %v1651 = vld [vmem:[#allocation9 + $0xf4] sm:$0xf]
          %v1652 = vld [vmem:[#allocation9 + $0xf8] sm:$0xf]
          %v1653 = vld [vmem:[#allocation9 + $0xfc] sm:$0xf]
          %v1654 = vld [vmem:[#allocation11] sm:$0x1]
          %v1656 = vlaneseq
          %v1657 = vshrl.u32 %v1656, 7
          %v1658 = vsub.s32 0, %v1657
          %v1659 = vrot.slane %v1654, %v1658
          %v1725 = vunpack.c.l.b16 %v1590
          %v1726 = vunpack.c.l.b16 %v1591
          %v1727 = vunpack.c.l.b16 %v1592
          %v1728 = vunpack.c.l.b16 %v1593
          %v1729 = vunpack.c.l.b16 %v1594
          %v1730 = vunpack.c.l.b16 %v1595
          %v1731 = vunpack.c.l.b16 %v1596
          %v1732 = vunpack.c.l.b16 %v1597
          %v1733 = vunpack.c.l.b16 %v1598
          %v1734 = vunpack.c.l.b16 %v1599
          %v1735 = vunpack.c.l.b16 %v1600
          %v1736 = vunpack.c.l.b16 %v1601
          %v1737 = vunpack.c.l.b16 %v1602
          %v1738 = vunpack.c.l.b16 %v1603
          %v1739 = vunpack.c.l.b16 %v1604
          %v1740 = vunpack.c.l.b16 %v1605
          %v1741 = vunpack.c.l.b16 %v1606
          %v1742 = vunpack.c.l.b16 %v1607
          %v1743 = vunpack.c.l.b16 %v1608
          %v1744 = vunpack.c.l.b16 %v1609
          %v1745 = vunpack.c.l.b16 %v1610
          %v1746 = vunpack.c.l.b16 %v1611
          %v1747 = vunpack.c.l.b16 %v1612
          %v1748 = vunpack.c.l.b16 %v1613
          %v1749 = vunpack.c.l.b16 %v1614
          %v1750 = vunpack.c.l.b16 %v1615
          %v1751 = vunpack.c.l.b16 %v1616
          %v1752 = vunpack.c.l.b16 %v1617
          %v1753 = vunpack.c.l.b16 %v1618
          %v1754 = vunpack.c.l.b16 %v1619
          %v1755 = vunpack.c.l.b16 %v1620
          %v1756 = vunpack.c.l.b16 %v1621
          %v1757 = vunpack.c.l.b16 %v1622
          %v1758 = vunpack.c.l.b16 %v1623
          %v1759 = vunpack.c.l.b16 %v1624
          %v1760 = vunpack.c.l.b16 %v1625
          %v1761 = vunpack.c.l.b16 %v1626
          %v1762 = vunpack.c.l.b16 %v1627
          %v1763 = vunpack.c.l.b16 %v1628
          %v1764 = vunpack.c.l.b16 %v1629
          %v1765 = vunpack.c.l.b16 %v1630
          %v1766 = vunpack.c.l.b16 %v1631
          %v1767 = vunpack.c.l.b16 %v1632
          %v1768 = vunpack.c.l.b16 %v1633
          %v1769 = vunpack.c.l.b16 %v1634
          %v1770 = vunpack.c.l.b16 %v1635
          %v1771 = vunpack.c.l.b16 %v1636
          %v1772 = vunpack.c.l.b16 %v1637
          %v1773 = vunpack.c.l.b16 %v1638
          %v1774 = vunpack.c.l.b16 %v1639
          %v1775 = vunpack.c.l.b16 %v1640
          %v1776 = vunpack.c.l.b16 %v1641
          %v1777 = vunpack.c.l.b16 %v1642
          %v1778 = vunpack.c.l.b16 %v1643
          %v1779 = vunpack.c.l.b16 %v1644
          %v1780 = vunpack.c.l.b16 %v1645
          %v1781 = vunpack.c.l.b16 %v1646
          %v1782 = vunpack.c.l.b16 %v1647
          %v1783 = vunpack.c.l.b16 %v1648
          %v1784 = vunpack.c.l.b16 %v1649
          %v1785 = vunpack.c.l.b16 %v1650
          %v1786 = vunpack.c.l.b16 %v1651
          %v1787 = vunpack.c.l.b16 %v1652
          %v1788 = vunpack.c.l.b16 %v1653
          %v1789 = vpack.c.b16 %v1726, %v1725
          %v1790 = vpack.c.b16 %v1728, %v1727
          %v1791 = vpack.c.b16 %v1730, %v1729
          %v1792 = vpack.c.b16 %v1732, %v1731
          %v1793 = vpack.c.b16 %v1734, %v1733
          %v1794 = vpack.c.b16 %v1736, %v1735
          %v1795 = vpack.c.b16 %v1738, %v1737
          %v1796 = vpack.c.b16 %v1740, %v1739
          %v1797 = vpack.c.b16 %v1742, %v1741
          %v1798 = vpack.c.b16 %v1744, %v1743
          %v1799 = vpack.c.b16 %v1746, %v1745
          %v1800 = vpack.c.b16 %v1748, %v1747
          %v1801 = vpack.c.b16 %v1750, %v1749
          %v1802 = vpack.c.b16 %v1752, %v1751
          %v1803 = vpack.c.b16 %v1754, %v1753
          %v1804 = vpack.c.b16 %v1756, %v1755
          %v1805 = vpack.c.b16 %v1758, %v1757
          %v1806 = vpack.c.b16 %v1760, %v1759
          %v1807 = vpack.c.b16 %v1762, %v1761
          %v1808 = vpack.c.b16 %v1764, %v1763
          %v1809 = vpack.c.b16 %v1766, %v1765
          %v1810 = vpack.c.b16 %v1768, %v1767
          %v1811 = vpack.c.b16 %v1770, %v1769
          %v1812 = vpack.c.b16 %v1772, %v1771
          %v1813 = vpack.c.b16 %v1774, %v1773
          %v1814 = vpack.c.b16 %v1776, %v1775
          %v1815 = vpack.c.b16 %v1778, %v1777
          %v1816 = vpack.c.b16 %v1780, %v1779
          %v1817 = vpack.c.b16 %v1782, %v1781
          %v1818 = vpack.c.b16 %v1784, %v1783
          %v1819 = vpack.c.b16 %v1786, %v1785
          %v1820 = vpack.c.b16 %v1788, %v1787
          %1853 = vmatprep.subr.bf16.mxu0 0
          %1854 = vmatpush1.bf16.msra.mxu0 %v1796
          %1855 = vmatprep.subr.bf16.mxu0 0
          %1856 = vmatpush1.bf16.msra.mxu0 %v1795
          %1857 = vmatprep.subr.bf16.mxu0 0
          %1858 = vmatpush1.bf16.msra.mxu0 %v1794
          %1859 = vmatprep.subr.bf16.mxu0 0
          %1860 = vmatpush1.bf16.msra.mxu0 %v1793
          %1861 = vmatprep.subr.bf16.mxu0 0
          %1862 = vmatpush1.bf16.msra.mxu0 %v1792
          %1863 = vmatprep.subr.bf16.mxu0 0
          %1864 = vmatpush1.bf16.msra.mxu0 %v1791
          %1865 = vmatprep.subr.bf16.mxu0 0
          %1866 = vmatpush1.bf16.msra.mxu0 %v1790
          %1867 = vmatprep.subr.bf16.mxu0 0
          %1868 = vmatpush1.bf16.msra.mxu0 %v1789
          %1869 = vmatprep.subr.bf16.mxu0 0
          %1870 = vmatpush2.bf16.msra.mxu0 %v1804
          %1871 = vmatprep.subr.bf16.mxu0 0
          %1872 = vmatpush2.bf16.msra.mxu0 %v1803
          %1873 = vmatprep.subr.bf16.mxu0 0
          %1874 = vmatpush2.bf16.msra.mxu0 %v1802
          %1875 = vmatprep.subr.bf16.mxu0 0
          %1876 = vmatpush2.bf16.msra.mxu0 %v1801
          %1877 = vmatprep.subr.bf16.mxu0 0
          %1878 = vmatpush2.bf16.msra.mxu0 %v1800
          %1879 = vmatprep.subr.bf16.mxu0 0
          %1880 = vmatpush2.bf16.msra.mxu0 %v1799
          %1881 = vmatprep.subr.bf16.mxu0 0
          %1882 = vmatpush2.bf16.msra.mxu0 %v1798
          %1883 = vmatprep.subr.bf16.mxu0 0
          %1884 = vmatpush2.bf16.msra.mxu0 %v1797
          %1885 = vmatprep.mubr.bf16.mxu0 %v1587
          %1886 = vmatmul.mubr.bf16.gmra.mxu0 %v1586
          %v1887 = vpop.f32.mrf.mxu0
          %v1888 = vadd.f32 %v1659, %v1887
          %v1889 = vpop.f32.mrf.mxu0
          %v1890 = vpop.f32.mrf.mxu0
          %v1891 = vpop.f32.mrf.mxu0
          %1892 = vdwg.mxu0
          %1893 = vmatprep.subr.bf16.mxu0 0
          %1894 = vmatpush1.bf16.msra.mxu0 %v1812
          %1895 = vmatprep.subr.bf16.mxu0 0
          %1896 = vmatpush1.bf16.msra.mxu0 %v1811
          %1897 = vmatprep.subr.bf16.mxu0 0
          %1898 = vmatpush1.bf16.msra.mxu0 %v1810
          %1899 = vmatprep.subr.bf16.mxu0 0
          %1900 = vmatpush1.bf16.msra.mxu0 %v1809
          %1901 = vmatprep.subr.bf16.mxu0 0
          %1902 = vmatpush1.bf16.msra.mxu0 %v1808
          %1903 = vmatprep.subr.bf16.mxu0 0
          %1904 = vmatpush1.bf16.msra.mxu0 %v1807
          %1905 = vmatprep.subr.bf16.mxu0 0
          %1906 = vmatpush1.bf16.msra.mxu0 %v1806
          %1907 = vmatprep.subr.bf16.mxu0 0
          %1908 = vmatpush1.bf16.msra.mxu0 %v1805
          %1909 = vmatprep.subr.bf16.mxu0 0
          %1910 = vmatpush2.bf16.msra.mxu0 %v1820
          %1911 = vmatprep.subr.bf16.mxu0 0
          %1912 = vmatpush2.bf16.msra.mxu0 %v1819
          %1913 = vmatprep.subr.bf16.mxu0 0
          %1914 = vmatpush2.bf16.msra.mxu0 %v1818
          %1915 = vmatprep.subr.bf16.mxu0 0
          %1916 = vmatpush2.bf16.msra.mxu0 %v1817
          %1917 = vmatprep.subr.bf16.mxu0 0
          %1918 = vmatpush2.bf16.msra.mxu0 %v1816
          %1919 = vmatprep.subr.bf16.mxu0 0
          %1920 = vmatpush2.bf16.msra.mxu0 %v1815
          %1921 = vmatprep.subr.bf16.mxu0 0
          %1922 = vmatpush2.bf16.msra.mxu0 %v1814
          %1923 = vmatprep.subr.bf16.mxu0 0
          %1924 = vmatpush2.bf16.msra.mxu0 %v1813
          %1925 = vmatprep.mubr.bf16.mxu0 %v1589
          %1926 = vmatmul.mubr.bf16.gmra.mxu0 %v1588
          %v1927 = vpop.f32.mrf.mxu0
          %v1928 = vadd.f32 %v1888, %v1927
          %v1929 = vpop.f32.mrf.mxu0
          %v1930 = vpop.f32.mrf.mxu0
          %v1931 = vpop.f32.mrf.mxu0
          %1932 = vdwg.mxu0
          %v1933 = vmax.f32 %v1928, 0.0
          %1934 = vst [vmem:[#allocation12] sm:$0xff] %v1933
        $region68: #{tpu_custom_call.1} parent=39 // pred_fallthru
          _
        // Predicated region
        $region69: #{tpu_custom_call.1} parent=39 // pred_check
          %p1935 = pneg %p152
        $region70: #{tpu_custom_call.1} parent=39 // pred_check_branch
          %1937 = sbr.rel (%p1935) target = $region72
        $region71: #{tpu_custom_call.1} parent=39 // pred_region
          %s1939 = ssub.s32 128, 128
          %1940 = vsyncadd [#allocation5], %s1939
          %s1942 = sshll.u32 [#allocation12], 4
          %s1943 = int_to_ptr.vmem [resolvable:$true] %s1942
          %1945 = dma.vmem_to_hbm [thread:$0]  %s1943, 128, %s5, [#allocation5]
        $region72: #{tpu_custom_call.1} parent=39 // pred_fallthru
          _
        // Predicated region
        $region73: #{tpu_custom_call.1} parent=39 // pred_check
          %p1946 = pneg %p152
        $region74: #{tpu_custom_call.1} parent=39 // pred_check_branch
          %1948 = sbr.rel (%p1946) target = $region76
        $region75: #{tpu_custom_call.1} parent=39 // pred_region
          %1949 = dma.done [#allocation5], 128
        $region76: #{tpu_custom_call.1} parent=39 // pred_fallthru
          _
      $region40: #{tpu_custom_call.1} parent=5 // pred_fallthru
        _
      %p1950 = scmp.le.s32.totalorder 2, %s19
      // Predicated region
      $region77: #{tpu_custom_call.1} parent=5 // pred_check
        %p1951 = pneg %p1950
      $region78: #{tpu_custom_call.1} parent=5 // pred_check_branch
        %1953 = sbr.rel (%p1951) target = $region80
      $region79: #{tpu_custom_call.1} parent=5 // pred_region
        %s1954 = ssub.s32 %s19, 2
      $region80: #{tpu_custom_call.1} parent=5 // pred_fallthru
        _
    $region6: #{tpu_custom_call.1} parent=1 // loop_footer
      %s23 = sadd.s32 1, %s19
    $region7: #{tpu_custom_call.1} parent=1 // loop_footer_branch
      %18 = sbr.rel target = $region3
    $region8: #{tpu_custom_call.1} parent=1 // loop_exit
      _
    %1955 = vsyncpa [#allocation4], 1
    %s1956 = scalar_lea.sflag [#allocation4], 1
    %1957 = vsyncpa %s1956, 1
    %1958 = vsyncpa [#allocation7], 1
    %s1959 = scalar_lea.sflag [#allocation7], 1
    %1960 = vsyncpa %s1959, 1
    %1961 = vsyncpa [#allocation10], 1
    %1962 = vsyncpa [#allocation5], 1
    %s1963 = scalar_lea.sflag [#allocation5], 1
    %1964 = vsyncpa %s1963, 1

</llo_original>
